<compile_context>
chip_gen: v6e
topology: v6e:2x2x1
jax: 0.10.0
libtpu: 0.0.40
codegen_flags: <defaults>
</compile_context>

<pallas_src>
import jax
import jax.numpy as jnp
from jax.experimental import pallas as pl
from jax.experimental.pallas import tpu as pltpu  # noqa: F401  (not needed at this size)

# ---------------- model hyper-parameters (small, consistent with the module) ----
S = 8          # sequence length
B = 2          # batch
D = 32         # d_model
H = 4          # nhead
HD = D // H    # head dim
DFF = 64       # dim_feedforward
N = S * B      # flattened token count
EPS = 1e-5     # nn.LayerNorm default eps

# rows of the packed bias / LayerNorm vector block
_ROW_QKB, _ROW_VB, _ROW_OB, _ROW_B1, _ROW_B2 = 0, 1, 2, 3, 4
_ROW_N1W, _ROW_N1B, _ROW_N2W, _ROW_N2B = 5, 6, 7, 8
_VEC_ROWS, _VEC_LANES = 16, 128


def _layer_norm(x, w, b):
    # x: (N, D); w, b: (1, D)
    mean = jnp.mean(x, axis=-1, keepdims=True)
    var = jnp.mean((x - mean) ** 2, axis=-1, keepdims=True)
    return (x - mean) * jax.lax.rsqrt(var + EPS) * w + b


def encoder_layer_kernel(x_ref, pos_ref, wqk_ref, wv_ref, wo_ref,
                         w1_ref, w2_ref, vec_ref, o_ref):
    x = x_ref[...]                               # (N, D), rows ordered (s, b)
    qk_in = x + pos_ref[...]

    # fused Q/K projection (Q side pre-scaled by 1/sqrt(HD) in weights + bias)
    qk = jnp.dot(qk_in, wqk_ref[...], preferred_element_type=jnp.float32) \
        + vec_ref[_ROW_QKB:_ROW_QKB + 1, 0:2 * D]
    v = jnp.dot(x, wv_ref[...], preferred_element_type=jnp.float32) \
        + vec_ref[_ROW_VB:_ROW_VB + 1, 0:D]

    qh = qk[:, 0:D].reshape(N, H, HD)
    kh = qk[:, D:2 * D].reshape(N, H, HD)
    vh = v.reshape(N, H, HD)

    # per-head scores over the joint (S*B) token axis
    scores = jnp.einsum('nhd,mhd->hnm', qh, kh,
                        preferred_element_type=jnp.float32)        # (H, N, N)

    # tokens only attend within their own batch element (row order is (s, b))
    row_b = jax.lax.broadcasted_iota(jnp.int32, (N, N), 0) % B
    col_b = jax.lax.broadcasted_iota(jnp.int32, (N, N), 1) % B
    same_batch = (row_b == col_b)[None, :, :]
    scores = jnp.where(same_batch, scores, -1e30)

    # softmax (masked entries underflow to exactly 0)
    scores = scores - jnp.max(scores, axis=-1, keepdims=True)
    p = jnp.exp(scores)
    denom = jnp.sum(p, axis=-1, keepdims=True)
    p = p * pl.reciprocal(denom, approx=False)   # exact; approx=True is a perf option
    ctx = jnp.einsum('hnm,mhd->nhd', p, vh,
                     preferred_element_type=jnp.float32).reshape(N, D)

    attn = jnp.dot(ctx, wo_ref[...], preferred_element_type=jnp.float32) \
        + vec_ref[_ROW_OB:_ROW_OB + 1, 0:D]

    # residual + norm1
    x1 = _layer_norm(x + attn,
                     vec_ref[_ROW_N1W:_ROW_N1W + 1, 0:D],
                     vec_ref[_ROW_N1B:_ROW_N1B + 1, 0:D])

    # feed-forward: linear2(relu(linear1(x)))
    h = jnp.dot(x1, w1_ref[...], preferred_element_type=jnp.float32) \
        + vec_ref[_ROW_B1:_ROW_B1 + 1, 0:DFF]
    h = jnp.maximum(h, 0.0)
    ffn = jnp.dot(h, w2_ref[...], preferred_element_type=jnp.float32) \
        + vec_ref[_ROW_B2:_ROW_B2 + 1, 0:D]

    # residual + norm2
    o_ref[...] = _layer_norm(x1 + ffn,
                             vec_ref[_ROW_N2W:_ROW_N2W + 1, 0:D],
                             vec_ref[_ROW_N2B:_ROW_N2B + 1, 0:D])


@jax.jit
def transformer_encoder_layer(src, pos, params):
    """src, pos: (S, B, D) float32 (PyTorch layout). Returns (S, B, D)."""
    (in_w, in_b, out_w, out_b, w1, b1, w2, b2, n1w, n1b, n2w, n2b) = params
    scale = HD ** -0.5

    # one-time prep outside the kernel: transposed weights, fused Q/K with the
    # softmax scale folded in, all tiny vectors packed into a single block.
    wqk_t = jnp.concatenate([in_w[0:D].T * scale, in_w[D:2 * D].T], axis=1)  # (D, 2D)
    wv_t = in_w[2 * D:3 * D].T                                               # (D, D)
    wo_t = out_w.T                                                           # (D, D)
    w1_t = w1.T                                                              # (D, DFF)
    w2_t = w2.T                                                              # (DFF, D)

    vecs = jnp.zeros((_VEC_ROWS, _VEC_LANES), jnp.float32)
    vecs = vecs.at[_ROW_QKB, 0:D].set(in_b[0:D] * scale)
    vecs = vecs.at[_ROW_QKB, D:2 * D].set(in_b[D:2 * D])
    vecs = vecs.at[_ROW_VB, 0:D].set(in_b[2 * D:3 * D])
    vecs = vecs.at[_ROW_OB, 0:D].set(out_b)
    vecs = vecs.at[_ROW_B1, 0:DFF].set(b1)
    vecs = vecs.at[_ROW_B2, 0:D].set(b2)
    vecs = vecs.at[_ROW_N1W, 0:D].set(n1w)
    vecs = vecs.at[_ROW_N1B, 0:D].set(n1b)
    vecs = vecs.at[_ROW_N2W, 0:D].set(n2w)
    vecs = vecs.at[_ROW_N2B, 0:D].set(n2b)

    # contiguous reshapes only (free bitcasts); token row order stays (s, b)
    x2d = src.reshape(N, D)
    p2d = pos.reshape(N, D)

    out = pl.pallas_call(
        encoder_layer_kernel,
        out_shape=jax.ShapeDtypeStruct((N, D), jnp.float32),
    )(x2d, p2d, wqk_t, wv_t, wo_t, w1_t, w2_t, vecs)

    return out.reshape(S, B, D)


def make_params(key):
    ks = jax.random.split(key, 12)

    def w(k, shape, scale_=0.05):
        return (scale_ * jax.random.normal(k, shape)).astype(jnp.float32)

    in_w = w(ks[0], (3 * D, D))
    in_b = w(ks[1], (3 * D,))
    out_w = w(ks[2], (D, D))
    out_b = w(ks[3], (D,))
    w1 = w(ks[4], (DFF, D))
    b1 = w(ks[5], (DFF,))
    w2 = w(ks[6], (D, DFF))
    b2 = w(ks[7], (D,))
    n1w = (1.0 + w(ks[8], (D,))).astype(jnp.float32)
    n1b = w(ks[9], (D,))
    n2w = (1.0 + w(ks[10], (D,))).astype(jnp.float32)
    n2b = w(ks[11], (D,))
    return (in_w, in_b, out_w, out_b, w1, b1, w2, b2, n1w, n1b, n2w, n2b)


def reference(src, pos, params):
    """Pure-JAX reference matching PyTorch eval-mode semantics."""
    (in_w, in_b, out_w, out_b, w1, b1, w2, b2, n1w, n1b, n2w, n2b) = params
    qk = src + pos                                   # (S, B, D)
    q = qk @ in_w[0:D].T + in_b[0:D]
    k = qk @ in_w[D:2 * D].T + in_b[D:2 * D]
    v = src @ in_w[2 * D:3 * D].T + in_b[2 * D:3 * D]
    qh = q.reshape(S, B, H, HD)
    kh = k.reshape(S, B, H, HD)
    vh = v.reshape(S, B, H, HD)
    s = jnp.einsum('sbhd,tbhd->bhst', qh, kh) / jnp.sqrt(jnp.float32(HD))
    a = jax.nn.softmax(s, axis=-1)
    ctx = jnp.einsum('bhst,tbhd->sbhd', a, vh).reshape(S, B, D)
    attn = ctx @ out_w.T + out_b

    def ln(y, w_, b_):
        m = jnp.mean(y, -1, keepdims=True)
        vv = jnp.mean((y - m) ** 2, -1, keepdims=True)
        return (y - m) / jnp.sqrt(vv + EPS) * w_ + b_

    x1 = ln(src + attn, n1w, n1b)
    ffn = jnp.maximum(x1 @ w1.T + b1, 0.0) @ w2.T + b2
    return ln(x1 + ffn, n2w, n2b)


if __name__ == "__main__":
    key = jax.random.PRNGKey(0)
    k_src, k_pos, k_par = jax.random.split(key, 3)
    src = jax.random.normal(k_src, (S, B, D), dtype=jnp.float32)
    pos = jax.random.normal(k_pos, (S, B, D), dtype=jnp.float32)
    params = make_params(k_par)

    out = transformer_encoder_layer(src, pos, params)
    out = jax.block_until_ready(out)

    ref = reference(src, pos, params)
    assert out.shape == (S, B, D)
    assert jnp.allclose(out, ref, atol=1e-4, rtol=1e-4), "mismatch vs reference"

    print("KERNEL_OK")
</pallas_src>

<mosaic_0001>
module attributes {stable_mosaic.version = 11 : i64} {
  func.func @encoder_layer_kernel(%arg0: memref<16x32xf32, #tpu.memory_space<vmem>>, %arg1: memref<16x32xf32, #tpu.memory_space<vmem>>, %arg2: memref<32x64xf32, #tpu.memory_space<vmem>>, %arg3: memref<32x32xf32, #tpu.memory_space<vmem>>, %arg4: memref<32x32xf32, #tpu.memory_space<vmem>>, %arg5: memref<32x64xf32, #tpu.memory_space<vmem>>, %arg6: memref<64x32xf32, #tpu.memory_space<vmem>>, %arg7: memref<16x128xf32, #tpu.memory_space<vmem>>, %arg8: memref<16x32xf32, #tpu.memory_space<vmem>>) attributes {dimension_semantics = [], scalar_prefetch = 0 : i64, scratch_operands = 0 : i64, tpu.core_type = #tpu.core_type<tc>} {
    %c0 = arith.constant 0 : index
    %c0_0 = arith.constant 0 : index
    %0 = vector.load %arg0[%c0, %c0_0] : memref<16x32xf32, #tpu.memory_space<vmem>>, vector<16x32xf32>
    %c0_1 = arith.constant 0 : index
    %c0_2 = arith.constant 0 : index
    %1 = vector.load %arg1[%c0_1, %c0_2] : memref<16x32xf32, #tpu.memory_space<vmem>>, vector<16x32xf32>
    %2 = arith.addf %0, %1 : vector<16x32xf32>
    %c0_3 = arith.constant 0 : index
    %c0_4 = arith.constant 0 : index
    %3 = vector.load %arg2[%c0_3, %c0_4] : memref<32x64xf32, #tpu.memory_space<vmem>>, vector<32x64xf32>
    %cst = arith.constant dense<0.000000e+00> : vector<16x64xf32>
    %4 = tpu.matmul %2, %3, %cst {dimension_numbers = #tpu.dot_dimension_numbers<[1], [0], [0], [1], [0, 0, 1, 1], [], []>} : vector<16x32xf32>, vector<32x64xf32>, vector<16x64xf32> -> vector<16x64xf32>
    %c0_5 = arith.constant 0 : index
    %c0_6 = arith.constant 0 : index
    %5 = vector.load %arg7[%c0_5, %c0_6] : memref<16x128xf32, #tpu.memory_space<vmem>>, vector<1x64xf32>
    %6 = vector.broadcast %5 : vector<1x64xf32> to vector<16x64xf32>
    %7 = arith.addf %4, %6 : vector<16x64xf32>
    %c0_7 = arith.constant 0 : index
    %c0_8 = arith.constant 0 : index
    %8 = vector.load %arg3[%c0_7, %c0_8] : memref<32x32xf32, #tpu.memory_space<vmem>>, vector<32x32xf32>
    %cst_9 = arith.constant dense<0.000000e+00> : vector<16x32xf32>
    %9 = tpu.matmul %0, %8, %cst_9 {dimension_numbers = #tpu.dot_dimension_numbers<[1], [0], [0], [1], [0, 0, 1, 1], [], []>} : vector<16x32xf32>, vector<32x32xf32>, vector<16x32xf32> -> vector<16x32xf32>
    %c1 = arith.constant 1 : index
    %c0_10 = arith.constant 0 : index
    %10 = vector.load %arg7[%c1, %c0_10] : memref<16x128xf32, #tpu.memory_space<vmem>>, vector<1x32xf32>
    %11 = vector.broadcast %10 : vector<1x32xf32> to vector<16x32xf32>
    %12 = arith.addf %9, %11 : vector<16x32xf32>
    %13 = vector.extract_strided_slice %7 {offsets = [0, 0], sizes = [16, 32], strides = [1, 1]} : vector<16x64xf32> to vector<16x32xf32>
    %14 = vector.shape_cast %13 : vector<16x32xf32> to vector<16x4x8xf32>
    %15 = vector.extract_strided_slice %7 {offsets = [0, 32], sizes = [16, 32], strides = [1, 1]} : vector<16x64xf32> to vector<16x32xf32>
    %16 = vector.shape_cast %15 : vector<16x32xf32> to vector<16x4x8xf32>
    %17 = vector.shape_cast %12 : vector<16x32xf32> to vector<16x4x8xf32>
    "tpu.trace_start"() <{level = 10 : i32, message = "nhd,mhd->hnm"}> : () -> ()
    %cst_11 = arith.constant dense<0.000000e+00> : vector<4x16x16xf32>
    %18 = tpu.matmul %14, %16, %cst_11 {dimension_numbers = #tpu.dot_dimension_numbers<[2], [2], [0], [0], [0, 1, 0, 0, 1, 0], [1], [1]>} : vector<16x4x8xf32>, vector<16x4x8xf32>, vector<4x16x16xf32> -> vector<4x16x16xf32>
    "tpu.trace_stop"() : () -> ()
    %19 = tpu.iota {dimensions = array<i32: 0>} : vector<16x16xi32>
    %c2_i32 = arith.constant 2 : i32
    %c0_i32 = arith.constant 0 : i32
    %20 = arith.cmpi eq, %c2_i32, %c0_i32 : i32
    %c1_i32 = arith.constant 1 : i32
    %21 = arith.select %20, %c1_i32, %c2_i32 : i32
    %22 = vector.broadcast %21 : i32 to vector<16x16xi32>
    %23 = arith.remsi %19, %22 : vector<16x16xi32>
    %c0_i32_12 = arith.constant 0 : i32
    %24 = vector.broadcast %c0_i32_12 : i32 to vector<16x16xi32>
    %25 = arith.cmpi ne, %23, %24 : vector<16x16xi32>
    %c0_i32_13 = arith.constant 0 : i32
    %26 = vector.broadcast %c0_i32_13 : i32 to vector<16x16xi32>
    %27 = arith.cmpi slt, %23, %26 : vector<16x16xi32>
    %c0_i32_14 = arith.constant 0 : i32
    %28 = arith.cmpi slt, %21, %c0_i32_14 : i32
    %29 = vector.broadcast %28 : i1 to vector<16x16xi1>
    %30 = vector.broadcast %29 : vector<16x16xi1> to vector<16x16xi1>
    %31 = arith.xori %27, %30 : vector<16x16xi1>
    %32 = arith.andi %31, %25 : vector<16x16xi1>
    %33 = vector.broadcast %21 : i32 to vector<16x16xi32>
    %34 = arith.addi %23, %33 : vector<16x16xi32>
    %35 = arith.select %32, %34, %23 : vector<16x16xi1>, vector<16x16xi32>
    %36 = tpu.iota {dimensions = array<i32: 1>} : vector<16x16xi32>
    %c2_i32_15 = arith.constant 2 : i32
    %c0_i32_16 = arith.constant 0 : i32
    %37 = arith.cmpi eq, %c2_i32_15, %c0_i32_16 : i32
    %c1_i32_17 = arith.constant 1 : i32
    %38 = arith.select %37, %c1_i32_17, %c2_i32_15 : i32
    %39 = vector.broadcast %38 : i32 to vector<16x16xi32>
    %40 = arith.remsi %36, %39 : vector<16x16xi32>
    %c0_i32_18 = arith.constant 0 : i32
    %41 = vector.broadcast %c0_i32_18 : i32 to vector<16x16xi32>
    %42 = arith.cmpi ne, %40, %41 : vector<16x16xi32>
    %c0_i32_19 = arith.constant 0 : i32
    %43 = vector.broadcast %c0_i32_19 : i32 to vector<16x16xi32>
    %44 = arith.cmpi slt, %40, %43 : vector<16x16xi32>
    %c0_i32_20 = arith.constant 0 : i32
    %45 = arith.cmpi slt, %38, %c0_i32_20 : i32
    %46 = vector.broadcast %45 : i1 to vector<16x16xi1>
    %47 = vector.broadcast %46 : vector<16x16xi1> to vector<16x16xi1>
    %48 = arith.xori %44, %47 : vector<16x16xi1>
    %49 = arith.andi %48, %42 : vector<16x16xi1>
    %50 = vector.broadcast %38 : i32 to vector<16x16xi32>
    %51 = arith.addi %40, %50 : vector<16x16xi32>
    %52 = arith.select %49, %51, %40 : vector<16x16xi1>, vector<16x16xi32>
    %53 = arith.cmpi eq, %35, %52 : vector<16x16xi32>
    %54 = vector.shape_cast %53 : vector<16x16xi1> to vector<1x16x16xi1>
    %cst_21 = arith.constant -1.000000e+30 : f32
    %55 = vector.shape_cast %54 : vector<1x16x16xi1> to vector<1x16x16xi1>
    %56 = vector.broadcast %55 : vector<1x16x16xi1> to vector<4x16x16xi1>
    %57 = vector.broadcast %cst_21 : f32 to vector<4x16x16xf32>
    %58 = arith.select %56, %18, %57 : vector<4x16x16xi1>, vector<4x16x16xf32>
    %cst_22 = arith.constant dense<0xFF800000> : vector<4x16xf32>
    %59 = vector.multi_reduction <maximumf>, %58, %cst_22 [2] : vector<4x16x16xf32> to vector<4x16xf32>
    %60 = vector.shape_cast %59 : vector<4x16xf32> to vector<4x16x1xf32>
    %61 = vector.broadcast %60 : vector<4x16x1xf32> to vector<4x16x16xf32>
    %62 = arith.subf %58, %61 : vector<4x16x16xf32>
    %63 = math.exp %62 : vector<4x16x16xf32>
    %cst_23 = arith.constant dense<0.000000e+00> : vector<4x16xf32>
    %64 = vector.multi_reduction <add>, %63, %cst_23 [2] : vector<4x16x16xf32> to vector<4x16xf32>
    %65 = vector.shape_cast %64 : vector<4x16xf32> to vector<4x16x1xf32>
    %66 = tpu.reciprocal %65 : vector<4x16x1xf32> -> vector<4x16x1xf32>
    %67 = vector.broadcast %66 : vector<4x16x1xf32> to vector<4x16x16xf32>
    %68 = arith.mulf %63, %67 : vector<4x16x16xf32>
    "tpu.trace_start"() <{level = 10 : i32, message = "hnm,mhd->nhd"}> : () -> ()
    %cst_24 = arith.constant dense<0.000000e+00> : vector<4x8x16xf32>
    %69 = tpu.matmul %17, %68, %cst_24 {dimension_numbers = #tpu.dot_dimension_numbers<[0], [2], [2], [1], [0, 1, 0, 2, 1, 1], [1], [0]>} : vector<16x4x8xf32>, vector<4x16x16xf32>, vector<4x8x16xf32> -> vector<4x8x16xf32>
    %70 = tpu.transpose %69, [2, 0, 1] : vector<4x8x16xf32> -> vector<16x4x8xf32>
    "tpu.trace_stop"() : () -> ()
    %71 = vector.shape_cast %70 : vector<16x4x8xf32> to vector<16x32xf32>
    %c0_25 = arith.constant 0 : index
    %c0_26 = arith.constant 0 : index
    %72 = vector.load %arg4[%c0_25, %c0_26] : memref<32x32xf32, #tpu.memory_space<vmem>>, vector<32x32xf32>
    %cst_27 = arith.constant dense<0.000000e+00> : vector<16x32xf32>
    %73 = tpu.matmul %71, %72, %cst_27 {dimension_numbers = #tpu.dot_dimension_numbers<[1], [0], [0], [1], [0, 0, 1, 1], [], []>} : vector<16x32xf32>, vector<32x32xf32>, vector<16x32xf32> -> vector<16x32xf32>
    %c2 = arith.constant 2 : index
    %c0_28 = arith.constant 0 : index
    %74 = vector.load %arg7[%c2, %c0_28] : memref<16x128xf32, #tpu.memory_space<vmem>>, vector<1x32xf32>
    %75 = vector.broadcast %74 : vector<1x32xf32> to vector<16x32xf32>
    %76 = arith.addf %73, %75 : vector<16x32xf32>
    %77 = arith.addf %0, %76 : vector<16x32xf32>
    %c5 = arith.constant 5 : index
    %c0_29 = arith.constant 0 : index
    %78 = vector.load %arg7[%c5, %c0_29] : memref<16x128xf32, #tpu.memory_space<vmem>>, vector<1x32xf32>
    %c6 = arith.constant 6 : index
    %c0_30 = arith.constant 0 : index
    %79 = vector.load %arg7[%c6, %c0_30] : memref<16x128xf32, #tpu.memory_space<vmem>>, vector<1x32xf32>
    %cst_31 = arith.constant dense<0.000000e+00> : vector<16xf32>
    %80 = vector.multi_reduction <add>, %77, %cst_31 [1] : vector<16x32xf32> to vector<16xf32>
    %81 = vector.shape_cast %80 : vector<16xf32> to vector<16x1xf32>
    %cst_32 = arith.constant 3.200000e+01 : f32
    %82 = vector.broadcast %cst_32 : f32 to vector<16x1xf32>
    %83 = arith.divf %81, %82 : vector<16x1xf32>
    %84 = vector.broadcast %83 : vector<16x1xf32> to vector<16x32xf32>
    %85 = arith.subf %77, %84 : vector<16x32xf32>
    %86 = arith.mulf %85, %85 : vector<16x32xf32>
    %cst_33 = arith.constant dense<0.000000e+00> : vector<16xf32>
    %87 = vector.multi_reduction <add>, %86, %cst_33 [1] : vector<16x32xf32> to vector<16xf32>
    %88 = vector.shape_cast %87 : vector<16xf32> to vector<16x1xf32>
    %cst_34 = arith.constant 3.200000e+01 : f32
    %89 = vector.broadcast %cst_34 : f32 to vector<16x1xf32>
    %90 = arith.divf %88, %89 : vector<16x1xf32>
    %91 = vector.broadcast %83 : vector<16x1xf32> to vector<16x32xf32>
    %92 = arith.subf %77, %91 : vector<16x32xf32>
    %cst_35 = arith.constant 9.99999974E-6 : f32
    %93 = vector.broadcast %cst_35 : f32 to vector<16x1xf32>
    %94 = arith.addf %90, %93 : vector<16x1xf32>
    %95 = math.rsqrt %94 : vector<16x1xf32>
    %96 = vector.broadcast %95 : vector<16x1xf32> to vector<16x32xf32>
    %97 = arith.mulf %92, %96 : vector<16x32xf32>
    %98 = vector.broadcast %78 : vector<1x32xf32> to vector<16x32xf32>
    %99 = arith.mulf %97, %98 : vector<16x32xf32>
    %100 = vector.broadcast %79 : vector<1x32xf32> to vector<16x32xf32>
    %101 = arith.addf %99, %100 : vector<16x32xf32>
    %c0_36 = arith.constant 0 : index
    %c0_37 = arith.constant 0 : index
    %102 = vector.load %arg5[%c0_36, %c0_37] : memref<32x64xf32, #tpu.memory_space<vmem>>, vector<32x64xf32>
    %cst_38 = arith.constant dense<0.000000e+00> : vector<16x64xf32>
    %103 = tpu.matmul %101, %102, %cst_38 {dimension_numbers = #tpu.dot_dimension_numbers<[1], [0], [0], [1], [0, 0, 1, 1], [], []>} : vector<16x32xf32>, vector<32x64xf32>, vector<16x64xf32> -> vector<16x64xf32>
    %c3 = arith.constant 3 : index
    %c0_39 = arith.constant 0 : index
    %104 = vector.load %arg7[%c3, %c0_39] : memref<16x128xf32, #tpu.memory_space<vmem>>, vector<1x64xf32>
    %105 = vector.broadcast %104 : vector<1x64xf32> to vector<16x64xf32>
    %106 = arith.addf %103, %105 : vector<16x64xf32>
    %cst_40 = arith.constant 0.000000e+00 : f32
    %107 = vector.broadcast %cst_40 : f32 to vector<16x64xf32>
    %108 = arith.maximumf %106, %107 : vector<16x64xf32>
    %c0_41 = arith.constant 0 : index
    %c0_42 = arith.constant 0 : index
    %109 = vector.load %arg6[%c0_41, %c0_42] : memref<64x32xf32, #tpu.memory_space<vmem>>, vector<64x32xf32>
    %cst_43 = arith.constant dense<0.000000e+00> : vector<16x32xf32>
    %110 = tpu.matmul %108, %109, %cst_43 {dimension_numbers = #tpu.dot_dimension_numbers<[1], [0], [0], [1], [0, 0, 1, 1], [], []>} : vector<16x64xf32>, vector<64x32xf32>, vector<16x32xf32> -> vector<16x32xf32>
    %c4 = arith.constant 4 : index
    %c0_44 = arith.constant 0 : index
    %111 = vector.load %arg7[%c4, %c0_44] : memref<16x128xf32, #tpu.memory_space<vmem>>, vector<1x32xf32>
    %112 = vector.broadcast %111 : vector<1x32xf32> to vector<16x32xf32>
    %113 = arith.addf %110, %112 : vector<16x32xf32>
    %114 = arith.addf %101, %113 : vector<16x32xf32>
    %c7 = arith.constant 7 : index
    %c0_45 = arith.constant 0 : index
    %115 = vector.load %arg7[%c7, %c0_45] : memref<16x128xf32, #tpu.memory_space<vmem>>, vector<1x32xf32>
    %c8 = arith.constant 8 : index
    %c0_46 = arith.constant 0 : index
    %116 = vector.load %arg7[%c8, %c0_46] : memref<16x128xf32, #tpu.memory_space<vmem>>, vector<1x32xf32>
    %cst_47 = arith.constant dense<0.000000e+00> : vector<16xf32>
    %117 = vector.multi_reduction <add>, %114, %cst_47 [1] : vector<16x32xf32> to vector<16xf32>
    %118 = vector.shape_cast %117 : vector<16xf32> to vector<16x1xf32>
    %cst_48 = arith.constant 3.200000e+01 : f32
    %119 = vector.broadcast %cst_48 : f32 to vector<16x1xf32>
    %120 = arith.divf %118, %119 : vector<16x1xf32>
    %121 = vector.broadcast %120 : vector<16x1xf32> to vector<16x32xf32>
    %122 = arith.subf %114, %121 : vector<16x32xf32>
    %123 = arith.mulf %122, %122 : vector<16x32xf32>
    %cst_49 = arith.constant dense<0.000000e+00> : vector<16xf32>
    %124 = vector.multi_reduction <add>, %123, %cst_49 [1] : vector<16x32xf32> to vector<16xf32>
    %125 = vector.shape_cast %124 : vector<16xf32> to vector<16x1xf32>
    %cst_50 = arith.constant 3.200000e+01 : f32
    %126 = vector.broadcast %cst_50 : f32 to vector<16x1xf32>
    %127 = arith.divf %125, %126 : vector<16x1xf32>
    %128 = vector.broadcast %120 : vector<16x1xf32> to vector<16x32xf32>
    %129 = arith.subf %114, %128 : vector<16x32xf32>
    %cst_51 = arith.constant 9.99999974E-6 : f32
    %130 = vector.broadcast %cst_51 : f32 to vector<16x1xf32>
    %131 = arith.addf %127, %130 : vector<16x1xf32>
    %132 = math.rsqrt %131 : vector<16x1xf32>
    %133 = vector.broadcast %132 : vector<16x1xf32> to vector<16x32xf32>
    %134 = arith.mulf %129, %133 : vector<16x32xf32>
    %135 = vector.broadcast %115 : vector<1x32xf32> to vector<16x32xf32>
    %136 = arith.mulf %134, %135 : vector<16x32xf32>
    %137 = vector.broadcast %116 : vector<1x32xf32> to vector<16x32xf32>
    %138 = arith.addf %136, %137 : vector<16x32xf32>
    %c0_52 = arith.constant 0 : index
    %c0_53 = arith.constant 0 : index
    %139 = vector.load %arg8[%c0_52, %c0_53] : memref<16x32xf32, #tpu.memory_space<vmem>>, vector<16x32xf32>
    tpu.vector_store %arg8[%c0_52, %c0_53], %138 {strides = array<i32>} : memref<16x32xf32, #tpu.memory_space<vmem>>, vector<16x32xf32>,
    return
  }
}

</mosaic_0001>

<llo_original>
// kernel: transformer_encoder_layer.1
$region0: #{transformer_encoder_layer.1}
  #allocation0 [shape = 'u32[]', space=smem, size = 0x4, offset = 0x4, fixed_abs, tag = 'smem constant byte address 0x4 - core index']
  #allocation1 [shape = 'u32[144,128]{1,0:T(1,128)}', space=vmem, size = 0x12000, scoped, tag = 'internal scratch']
  %s0 = inlined_call_operand.vmem [shape: f32[16,32], index: 0, kind: input, shape index: {}]
  %s1 = inlined_call_operand.vmem [shape: f32[16,32], index: 1, kind: input, shape index: {}]
  %s2 = inlined_call_operand.vmem [shape: f32[32,64], index: 2, kind: input, shape index: {}]
  %s3 = inlined_call_operand.vmem [shape: f32[32,32], index: 3, kind: input, shape index: {}]
  %s4 = inlined_call_operand.vmem [shape: f32[32,32], index: 4, kind: input, shape index: {}]
  %s5 = inlined_call_operand.vmem [shape: f32[32,64], index: 5, kind: input, shape index: {}]
  %s6 = inlined_call_operand.vmem [shape: f32[64,32], index: 6, kind: input, shape index: {}]
  %s7 = inlined_call_operand.vmem [shape: f32[16,128], index: 7, kind: input, shape index: {}]
  %s8 = inlined_call_operand.hbm [shape: f32[16,32], index: 8, kind: output, shape index: {}]
  %s9 = sld [smem:[#allocation0]]
  $region42: #{transformer_encoder_layer.1} parent=0
    _
  %s11 = ssub.s32 1, %s9
  %s12 = scalar_select 0, %s11, %s9
  $region1: #{transformer_encoder_layer.1} parent=0
    #allocation2 [shape = 'u8[8192]{0}', space=vmem, size = 0x2000, scoped, tag = 'output window, operand 0, single buffered']
    #allocation3 [shape = 's32[1]{0}', space=sflag, size = 0x4, scoped, tag = 'scoped memory for transformer_encoder_layer.1']
    %13 = vsyncpa [#allocation3], 0
    // Predicated region
    $region2: #{transformer_encoder_layer.1} parent=1 // pred_check
      _
    $region3: #{transformer_encoder_layer.1} parent=1 // pred_check_branch
      %15 = sbr.rel (0) target = $region5
    $region4: #{transformer_encoder_layer.1} parent=1 // pred_region
      _
    $region5: #{transformer_encoder_layer.1} parent=1 // pred_fallthru
      _
    // Predicated region
    $region6: #{transformer_encoder_layer.1} parent=1 // pred_check
      _
    $region7: #{transformer_encoder_layer.1} parent=1 // pred_check_branch
      %17 = sbr.rel (0) target = $region9
    $region8: #{transformer_encoder_layer.1} parent=1 // pred_region
      _
    $region9: #{transformer_encoder_layer.1} parent=1 // pred_fallthru
      _
    // Predicated region
    $region10: #{transformer_encoder_layer.1} parent=1 // pred_check
      _
    $region11: #{transformer_encoder_layer.1} parent=1 // pred_check_branch
      %19 = sbr.rel (0) target = $region13
    $region12: #{transformer_encoder_layer.1} parent=1 // pred_region
      _
    $region13: #{transformer_encoder_layer.1} parent=1 // pred_fallthru
      _
    // Predicated region
    $region14: #{transformer_encoder_layer.1} parent=1 // pred_check
      _
    $region15: #{transformer_encoder_layer.1} parent=1 // pred_check_branch
      %21 = sbr.rel (0) target = $region17
    $region16: #{transformer_encoder_layer.1} parent=1 // pred_region
      _
    $region17: #{transformer_encoder_layer.1} parent=1 // pred_fallthru
      _
    // Predicated region
    $region18: #{transformer_encoder_layer.1} parent=1 // pred_check
      _
    $region19: #{transformer_encoder_layer.1} parent=1 // pred_check_branch
      %23 = sbr.rel (0) target = $region21
    $region20: #{transformer_encoder_layer.1} parent=1 // pred_region
      _
    $region21: #{transformer_encoder_layer.1} parent=1 // pred_fallthru
      _
    // Predicated region
    $region22: #{transformer_encoder_layer.1} parent=1 // pred_check
      _
    $region23: #{transformer_encoder_layer.1} parent=1 // pred_check_branch
      %25 = sbr.rel (0) target = $region25
    $region24: #{transformer_encoder_layer.1} parent=1 // pred_region
      _
    $region25: #{transformer_encoder_layer.1} parent=1 // pred_fallthru
      _
    // Predicated region
    $region26: #{transformer_encoder_layer.1} parent=1 // pred_check
      _
    $region27: #{transformer_encoder_layer.1} parent=1 // pred_check_branch
      %27 = sbr.rel (0) target = $region29
    $region28: #{transformer_encoder_layer.1} parent=1 // pred_region
      _
    $region29: #{transformer_encoder_layer.1} parent=1 // pred_fallthru
      _
    // Predicated region
    $region30: #{transformer_encoder_layer.1} parent=1 // pred_check
      _
    $region31: #{transformer_encoder_layer.1} parent=1 // pred_check_branch
      %29 = sbr.rel (0) target = $region33
    $region32: #{transformer_encoder_layer.1} parent=1 // pred_region
      _
    $region33: #{transformer_encoder_layer.1} parent=1 // pred_fallthru
      _
    %v30 = vld [vmem:[%s0] sm:$0xff]
    %v31 = vld [vmem:[%s0 + $0x8] sm:$0xff]
    %v32 = vld [vmem:[%s1] sm:$0xff]
    %v33 = vld [vmem:[%s1 + $0x8] sm:$0xff]
    %v34 = vadd.f32 %v30, %v32
    %v35 = vadd.f32 %v31, %v33
    %v36 = vld [vmem:[%s2] sm:$0xff]
    %v37 = vld [vmem:[%s2 + $0x8] sm:$0xff]
    %v38 = vld [vmem:[%s2 + $0x10] sm:$0xff]
    %v39 = vld [vmem:[%s2 + $0x18] sm:$0xff]
    %v40 = vld [vmem:[%s7] sm:$0x1]
    %v41 = vlaneseq
    %v42 = vshrl.u32 %v41, 7
    %v43 = vsub.s32 0, %v42
    %v44 = vrot.slane %v40, %v43
    %vm45 = vcmask 261120
    %v47 = vsel %vm45, %v34, 0
    %v50 = vsel %vm45, %v35, 0
    %52 = vmatprep.subr.mxu0 0.0
    %53 = vmatpush1.msra.mxu0 0.0
    %54 = vmatprep.subr.mxu0 0.0
    %55 = vmatpush1.msra.mxu0 0.0
    %56 = vmatprep.subr.mxu0 0.0
    %57 = vmatpush1.msra.mxu0 0.0
    %58 = vmatprep.subr.mxu0 0.0
    %59 = vmatpush1.msra.mxu0 0.0
    %60 = vmatprep.subr.mxu0 0.0
    %61 = vmatpush1.msra.mxu0 0.0
    %62 = vmatprep.subr.mxu0 0.0
    %63 = vmatpush1.msra.mxu0 0.0
    %64 = vmatprep.subr.mxu0 0.0
    %65 = vmatpush1.msra.mxu0 0.0
    %66 = vmatprep.subr.mxu0 0.0
    %67 = vmatpush1.msra.mxu0 0.0
    %68 = vmatprep.subr.mxu0 0.0
    %69 = vmatpush1.msra.mxu0 0.0
    %70 = vmatprep.subr.mxu0 0.0
    %71 = vmatpush1.msra.mxu0 0.0
    %72 = vmatprep.subr.mxu0 0.0
    %73 = vmatpush1.msra.mxu0 0.0
    %74 = vmatprep.subr.mxu0 0.0
    %75 = vmatpush1.msra.mxu0 0.0
    %76 = vmatprep.subr.mxu0 0.0
    %77 = vmatpush1.msra.mxu0 %v39
    %78 = vmatprep.subr.mxu0 0.0
    %79 = vmatpush1.msra.mxu0 %v38
    %80 = vmatprep.subr.mxu0 0.0
    %81 = vmatpush1.msra.mxu0 %v37
    %82 = vmatprep.subr.mxu0 0.0
    %83 = vmatpush1.msra.mxu0 %v36
    %84 = vmatprep.subr.mxu0 0.0
    %85 = vmatpush2.msra.mxu0 0.0
    %86 = vmatprep.subr.mxu0 0.0
    %87 = vmatpush2.msra.mxu0 0.0
    %88 = vmatprep.subr.mxu0 0.0
    %89 = vmatpush2.msra.mxu0 0.0
    %90 = vmatprep.subr.mxu0 0.0
    %91 = vmatpush2.msra.mxu0 0.0
    %92 = vmatprep.subr.mxu0 0.0
    %93 = vmatpush2.msra.mxu0 0.0
    %94 = vmatprep.subr.mxu0 0.0
    %95 = vmatpush2.msra.mxu0 0.0
    %96 = vmatprep.subr.mxu0 0.0
    %97 = vmatpush2.msra.mxu0 0.0
    %98 = vmatprep.subr.mxu0 0.0
    %99 = vmatpush2.msra.mxu0 0.0
    %100 = vmatprep.subr.mxu0 0.0
    %101 = vmatpush2.msra.mxu0 0.0
    %102 = vmatprep.subr.mxu0 0.0
    %103 = vmatpush2.msra.mxu0 0.0
    %104 = vmatprep.subr.mxu0 0.0
    %105 = vmatpush2.msra.mxu0 0.0
    %106 = vmatprep.subr.mxu0 0.0
    %107 = vmatpush2.msra.mxu0 0.0
    %108 = vmatprep.subr.mxu0 0.0
    %109 = vmatpush2.msra.mxu0 0.0
    %110 = vmatprep.subr.mxu0 0.0
    %111 = vmatpush2.msra.mxu0 0.0
    %112 = vmatprep.subr.mxu0 0.0
    %113 = vmatpush2.msra.mxu0 0.0
    %114 = vmatprep.subr.mxu0 0.0
    %115 = vmatpush2.msra.mxu0 0.0
    %116 = vmatprep.mubr.f32.mxu0 0.0
    %117 = vmatmul.mubr.f32.gmra.mxu0 %v47
    %v118 = vpop.f32.mrf.mxu0
    %v119 = vadd.f32 %v44, %v118
    %v120 = vpop.f32.mrf.mxu0
    %121 = vmatprep.mubr.f32.mxu0 0.0
    %122 = vmatmul.mubr.f32.gmra.mxu0 %v50
    %v123 = vpop.f32.mrf.mxu0
    %v124 = vadd.f32 %v44, %v123
    %v125 = vpop.f32.mrf.mxu0
    %126 = vdwg.mxu0
    %v127 = vld [vmem:[%s3] sm:$0xff]
    %v128 = vld [vmem:[%s3 + $0x8] sm:$0xff]
    %v129 = vld [vmem:[%s3 + $0x10] sm:$0xff]
    %v130 = vld [vmem:[%s3 + $0x18] sm:$0xff]
    %v131 = vld [vmem:[%s7 + $0x1] sm:$0x1]
    %v132 = vlaneseq
    %v133 = vshrl.u32 %v132, 7
    %v134 = vsub.s32 0, %v133
    %v135 = vrot.slane %v131, %v134
    %v137 = vsel %vm45, %v30, 0
    %v140 = vsel %vm45, %v31, 0
    %142 = vmatprep.subr.mxu0 0.0
    %143 = vmatpush1.msra.mxu0 0.0
    %144 = vmatprep.subr.mxu0 0.0
    %145 = vmatpush1.msra.mxu0 0.0
    %146 = vmatprep.subr.mxu0 0.0
    %147 = vmatpush1.msra.mxu0 0.0
    %148 = vmatprep.subr.mxu0 0.0
    %149 = vmatpush1.msra.mxu0 0.0
    %150 = vmatprep.subr.mxu0 0.0
    %151 = vmatpush1.msra.mxu0 0.0
    %152 = vmatprep.subr.mxu0 0.0
    %153 = vmatpush1.msra.mxu0 0.0
    %154 = vmatprep.subr.mxu0 0.0
    %155 = vmatpush1.msra.mxu0 0.0
    %156 = vmatprep.subr.mxu0 0.0
    %157 = vmatpush1.msra.mxu0 0.0
    %158 = vmatprep.subr.mxu0 0.0
    %159 = vmatpush1.msra.mxu0 0.0
    %160 = vmatprep.subr.mxu0 0.0
    %161 = vmatpush1.msra.mxu0 0.0
    %162 = vmatprep.subr.mxu0 0.0
    %163 = vmatpush1.msra.mxu0 0.0
    %164 = vmatprep.subr.mxu0 0.0
    %165 = vmatpush1.msra.mxu0 0.0
    %166 = vmatprep.subr.mxu0 0.0
    %167 = vmatpush1.msra.mxu0 %v130
    %168 = vmatprep.subr.mxu0 0.0
    %169 = vmatpush1.msra.mxu0 %v129
    %170 = vmatprep.subr.mxu0 0.0
    %171 = vmatpush1.msra.mxu0 %v128
    %172 = vmatprep.subr.mxu0 0.0
    %173 = vmatpush1.msra.mxu0 %v127
    %174 = vmatprep.subr.mxu0 0.0
    %175 = vmatpush2.msra.mxu0 0.0
    %176 = vmatprep.subr.mxu0 0.0
    %177 = vmatpush2.msra.mxu0 0.0
    %178 = vmatprep.subr.mxu0 0.0
    %179 = vmatpush2.msra.mxu0 0.0
    %180 = vmatprep.subr.mxu0 0.0
    %181 = vmatpush2.msra.mxu0 0.0
    %182 = vmatprep.subr.mxu0 0.0
    %183 = vmatpush2.msra.mxu0 0.0
    %184 = vmatprep.subr.mxu0 0.0
    %185 = vmatpush2.msra.mxu0 0.0
    %186 = vmatprep.subr.mxu0 0.0
    %187 = vmatpush2.msra.mxu0 0.0
    %188 = vmatprep.subr.mxu0 0.0
    %189 = vmatpush2.msra.mxu0 0.0
    %190 = vmatprep.subr.mxu0 0.0
    %191 = vmatpush2.msra.mxu0 0.0
    %192 = vmatprep.subr.mxu0 0.0
    %193 = vmatpush2.msra.mxu0 0.0
    %194 = vmatprep.subr.mxu0 0.0
    %195 = vmatpush2.msra.mxu0 0.0
    %196 = vmatprep.subr.mxu0 0.0
    %197 = vmatpush2.msra.mxu0 0.0
    %198 = vmatprep.subr.mxu0 0.0
    %199 = vmatpush2.msra.mxu0 0.0
    %200 = vmatprep.subr.mxu0 0.0
    %201 = vmatpush2.msra.mxu0 0.0
    %202 = vmatprep.subr.mxu0 0.0
    %203 = vmatpush2.msra.mxu0 0.0
    %204 = vmatprep.subr.mxu0 0.0
    %205 = vmatpush2.msra.mxu0 0.0
    %206 = vmatprep.mubr.f32.mxu0 0.0
    %207 = vmatmul.mubr.f32.gmra.mxu0 %v137
    %v208 = vpop.f32.mrf.mxu0
    %v209 = vadd.f32 %v135, %v208
    %v210 = vpop.f32.mrf.mxu0
    %211 = vmatprep.mubr.f32.mxu0 0.0
    %212 = vmatmul.mubr.f32.gmra.mxu0 %v140
    %v213 = vpop.f32.mrf.mxu0
    %v214 = vadd.f32 %v135, %v213
    %v215 = vpop.f32.mrf.mxu0
    %216 = vdwg.mxu0
    %219 = vrot.lane.b32.xlu0 %v119, 120
    %v220 = vpop.permute.xlu0 %219
    %221 = vrot.lane.b32.xlu0 %v124, 120
    %v222 = vpop.permute.xlu0 %221
    %223 = vrot.lane.b32.xlu0 %v119, 112
    %v224 = vpop.permute.xlu0 %223
    %225 = vrot.lane.b32.xlu0 %v124, 112
    %v226 = vpop.permute.xlu0 %225
    %227 = vrot.lane.b32.xlu0 %v119, 104
    %v228 = vpop.permute.xlu0 %227
    %229 = vrot.lane.b32.xlu0 %v124, 104
    %v230 = vpop.permute.xlu0 %229
    %233 = vrot.lane.b32.xlu0 %v209, 120
    %v234 = vpop.permute.xlu0 %233
    %235 = vrot.lane.b32.xlu0 %v214, 120
    %v236 = vpop.permute.xlu0 %235
    %239 = vrot.lane.b32.xlu0 %v209, 112
    %v240 = vpop.permute.xlu0 %239
    %241 = vrot.lane.b32.xlu0 %v214, 112
    %v242 = vpop.permute.xlu0 %241
    %245 = vrot.lane.b32.xlu0 %v209, 104
    %v246 = vpop.permute.xlu0 %245
    %247 = vrot.lane.b32.xlu0 %v214, 104
    %v248 = vpop.permute.xlu0 %247
    %251 = vrot.lane.b32.xlu0 %v119, 96
    %v252 = vpop.permute.xlu0 %251
    %253 = vrot.lane.b32.xlu0 %v124, 96
    %v254 = vpop.permute.xlu0 %253
    %255 = vrot.lane.b32.xlu0 %v220, 96
    %v256 = vpop.permute.xlu0 %255
    %257 = vrot.lane.b32.xlu0 %v222, 96
    %v258 = vpop.permute.xlu0 %257
    %259 = vrot.lane.b32.xlu0 %v224, 96
    %v260 = vpop.permute.xlu0 %259
    %261 = vrot.lane.b32.xlu0 %v226, 96
    %v262 = vpop.permute.xlu0 %261
    %263 = vrot.lane.b32.xlu0 %v228, 96
    %v264 = vpop.permute.xlu0 %263
    %265 = vrot.lane.b32.xlu0 %v230, 96
    %v266 = vpop.permute.xlu0 %265
    %275 = vxpose.xlu0.b32.start [1/16] %v252, 128
    %276 = vxpose.xlu0.b32.cont [2/16] %v254, 128
    %277 = vxpose.xlu0.b32.cont [3/16] 0.0, 128
    %278 = vxpose.xlu0.b32.cont [4/16] 0.0, 128
    %279 = vxpose.xlu0.b32.cont [5/16] 0.0, 128
    %280 = vxpose.xlu0.b32.cont [6/16] 0.0, 128
    %281 = vxpose.xlu0.b32.cont [7/16] 0.0, 128
    %282 = vxpose.xlu0.b32.cont [8/16] 0.0, 128
    %283 = vxpose.xlu0.b32.cont [9/16] 0.0, 128
    %284 = vxpose.xlu0.b32.cont [10/16] 0.0, 128
    %285 = vxpose.xlu0.b32.cont [11/16] 0.0, 128
    %286 = vxpose.xlu0.b32.cont [12/16] 0.0, 128
    %287 = vxpose.xlu0.b32.cont [13/16] 0.0, 128
    %288 = vxpose.xlu0.b32.cont [14/16] 0.0, 128
    %289 = vxpose.xlu0.b32.cont [15/16] 0.0, 128
    %290 = vxpose.xlu0.b32.end [16/16] 0.0, 128
    %v291 = vpop.trf.xlu0
    %v292 = vpop.trf.xlu0
    %v293 = vpop.trf.xlu0
    %v294 = vpop.trf.xlu0
    %v295 = vpop.trf.xlu0
    %v296 = vpop.trf.xlu0
    %v297 = vpop.trf.xlu0
    %v298 = vpop.trf.xlu0
    %v299 = vpop.trf.xlu0
    %v300 = vpop.trf.xlu0
    %v301 = vpop.trf.xlu0
    %v302 = vpop.trf.xlu0
    %v303 = vpop.trf.xlu0
    %v304 = vpop.trf.xlu0
    %v305 = vpop.trf.xlu0
    %v306 = vpop.trf.xlu0
    %307 = vxpose.xlu0.b32.start [1/16] %v256, 128
    %308 = vxpose.xlu0.b32.cont [2/16] %v258, 128
    %309 = vxpose.xlu0.b32.cont [3/16] 0.0, 128
    %310 = vxpose.xlu0.b32.cont [4/16] 0.0, 128
    %311 = vxpose.xlu0.b32.cont [5/16] 0.0, 128
    %312 = vxpose.xlu0.b32.cont [6/16] 0.0, 128
    %313 = vxpose.xlu0.b32.cont [7/16] 0.0, 128
    %314 = vxpose.xlu0.b32.cont [8/16] 0.0, 128
    %315 = vxpose.xlu0.b32.cont [9/16] 0.0, 128
    %316 = vxpose.xlu0.b32.cont [10/16] 0.0, 128
    %317 = vxpose.xlu0.b32.cont [11/16] 0.0, 128
    %318 = vxpose.xlu0.b32.cont [12/16] 0.0, 128
    %319 = vxpose.xlu0.b32.cont [13/16] 0.0, 128
    %320 = vxpose.xlu0.b32.cont [14/16] 0.0, 128
    %321 = vxpose.xlu0.b32.cont [15/16] 0.0, 128
    %322 = vxpose.xlu0.b32.end [16/16] 0.0, 128
    %v323 = vpop.trf.xlu0
    %v324 = vpop.trf.xlu0
    %v325 = vpop.trf.xlu0
    %v326 = vpop.trf.xlu0
    %v327 = vpop.trf.xlu0
    %v328 = vpop.trf.xlu0
    %v329 = vpop.trf.xlu0
    %v330 = vpop.trf.xlu0
    %v331 = vpop.trf.xlu0
    %v332 = vpop.trf.xlu0
    %v333 = vpop.trf.xlu0
    %v334 = vpop.trf.xlu0
    %v335 = vpop.trf.xlu0
    %v336 = vpop.trf.xlu0
    %v337 = vpop.trf.xlu0
    %v338 = vpop.trf.xlu0
    %339 = vxpose.xlu0.b32.start [1/16] %v260, 128
    %340 = vxpose.xlu0.b32.cont [2/16] %v262, 128
    %341 = vxpose.xlu0.b32.cont [3/16] 0.0, 128
    %342 = vxpose.xlu0.b32.cont [4/16] 0.0, 128
    %343 = vxpose.xlu0.b32.cont [5/16] 0.0, 128
    %344 = vxpose.xlu0.b32.cont [6/16] 0.0, 128
    %345 = vxpose.xlu0.b32.cont [7/16] 0.0, 128
    %346 = vxpose.xlu0.b32.cont [8/16] 0.0, 128
    %347 = vxpose.xlu0.b32.cont [9/16] 0.0, 128
    %348 = vxpose.xlu0.b32.cont [10/16] 0.0, 128
    %349 = vxpose.xlu0.b32.cont [11/16] 0.0, 128
    %350 = vxpose.xlu0.b32.cont [12/16] 0.0, 128
    %351 = vxpose.xlu0.b32.cont [13/16] 0.0, 128
    %352 = vxpose.xlu0.b32.cont [14/16] 0.0, 128
    %353 = vxpose.xlu0.b32.cont [15/16] 0.0, 128
    %354 = vxpose.xlu0.b32.end [16/16] 0.0, 128
    %v355 = vpop.trf.xlu0
    %v356 = vpop.trf.xlu0
    %v357 = vpop.trf.xlu0
    %v358 = vpop.trf.xlu0
    %v359 = vpop.trf.xlu0
    %v360 = vpop.trf.xlu0
    %v361 = vpop.trf.xlu0
    %v362 = vpop.trf.xlu0
    %v363 = vpop.trf.xlu0
    %v364 = vpop.trf.xlu0
    %v365 = vpop.trf.xlu0
    %v366 = vpop.trf.xlu0
    %v367 = vpop.trf.xlu0
    %v368 = vpop.trf.xlu0
    %v369 = vpop.trf.xlu0
    %v370 = vpop.trf.xlu0
    %371 = vxpose.xlu0.b32.start [1/16] %v264, 128
    %372 = vxpose.xlu0.b32.cont [2/16] %v266, 128
    %373 = vxpose.xlu0.b32.cont [3/16] 0.0, 128
    %374 = vxpose.xlu0.b32.cont [4/16] 0.0, 128
    %375 = vxpose.xlu0.b32.cont [5/16] 0.0, 128
    %376 = vxpose.xlu0.b32.cont [6/16] 0.0, 128
    %377 = vxpose.xlu0.b32.cont [7/16] 0.0, 128
    %378 = vxpose.xlu0.b32.cont [8/16] 0.0, 128
    %379 = vxpose.xlu0.b32.cont [9/16] 0.0, 128
    %380 = vxpose.xlu0.b32.cont [10/16] 0.0, 128
    %381 = vxpose.xlu0.b32.cont [11/16] 0.0, 128
    %382 = vxpose.xlu0.b32.cont [12/16] 0.0, 128
    %383 = vxpose.xlu0.b32.cont [13/16] 0.0, 128
    %384 = vxpose.xlu0.b32.cont [14/16] 0.0, 128
    %385 = vxpose.xlu0.b32.cont [15/16] 0.0, 128
    %386 = vxpose.xlu0.b32.end [16/16] 0.0, 128
    %v387 = vpop.trf.xlu0
    %v388 = vpop.trf.xlu0
    %v389 = vpop.trf.xlu0
    %v390 = vpop.trf.xlu0
    %v391 = vpop.trf.xlu0
    %v392 = vpop.trf.xlu0
    %v393 = vpop.trf.xlu0
    %v394 = vpop.trf.xlu0
    %v395 = vpop.trf.xlu0
    %v396 = vpop.trf.xlu0
    %v397 = vpop.trf.xlu0
    %v398 = vpop.trf.xlu0
    %v399 = vpop.trf.xlu0
    %v400 = vpop.trf.xlu0
    %v401 = vpop.trf.xlu0
    %v402 = vpop.trf.xlu0
    %vm403 = vcmask 64512
    %v404 = vsel %vm403, %v119, 0
    %v406 = vsel %vm403, %v124, 0
    %408 = vmatprep.subr.mxu0 0.0
    %409 = vmatpush1.msra.mxu0 0.0
    %410 = vmatprep.subr.mxu0 0.0
    %411 = vmatpush1.msra.mxu0 0.0
    %412 = vmatprep.subr.mxu0 0.0
    %413 = vmatpush1.msra.mxu0 0.0
    %414 = vmatprep.subr.mxu0 0.0
    %415 = vmatpush1.msra.mxu0 0.0
    %416 = vmatprep.subr.mxu0 0.0
    %417 = vmatpush1.msra.mxu0 0.0
    %418 = vmatprep.subr.mxu0 0.0
    %419 = vmatpush1.msra.mxu0 0.0
    %420 = vmatprep.subr.mxu0 0.0
    %421 = vmatpush1.msra.mxu0 0.0
    %422 = vmatprep.subr.mxu0 0.0
    %423 = vmatpush1.msra.mxu0 0.0
    %424 = vmatprep.subr.mxu0 0.0
    %425 = vmatpush1.msra.mxu0 0.0
    %426 = vmatprep.subr.mxu0 0.0
    %427 = vmatpush1.msra.mxu0 0.0
    %428 = vmatprep.subr.mxu0 0.0
    %429 = vmatpush1.msra.mxu0 0.0
    %430 = vmatprep.subr.mxu0 0.0
    %431 = vmatpush1.msra.mxu0 0.0
    %432 = vmatprep.subr.mxu0 0.0
    %433 = vmatpush1.msra.mxu0 0.0
    %434 = vmatprep.subr.mxu0 0.0
    %435 = vmatpush1.msra.mxu0 0.0
    %436 = vmatprep.subr.mxu0 0.0
    %437 = vmatpush1.msra.mxu0 0.0
    %438 = vmatprep.subr.mxu0 0.0
    %439 = vmatpush1.msra.mxu0 %v291
    %440 = vmatprep.subr.mxu0 0.0
    %441 = vmatpush2.msra.mxu0 0.0
    %442 = vmatprep.subr.mxu0 0.0
    %443 = vmatpush2.msra.mxu0 0.0
    %444 = vmatprep.subr.mxu0 0.0
    %445 = vmatpush2.msra.mxu0 0.0
    %446 = vmatprep.subr.mxu0 0.0
    %447 = vmatpush2.msra.mxu0 0.0
    %448 = vmatprep.subr.mxu0 0.0
    %449 = vmatpush2.msra.mxu0 0.0
    %450 = vmatprep.subr.mxu0 0.0
    %451 = vmatpush2.msra.mxu0 0.0
    %452 = vmatprep.subr.mxu0 0.0
    %453 = vmatpush2.msra.mxu0 0.0
    %454 = vmatprep.subr.mxu0 0.0
    %455 = vmatpush2.msra.mxu0 0.0
    %456 = vmatprep.subr.mxu0 0.0
    %457 = vmatpush2.msra.mxu0 0.0
    %458 = vmatprep.subr.mxu0 0.0
    %459 = vmatpush2.msra.mxu0 0.0
    %460 = vmatprep.subr.mxu0 0.0
    %461 = vmatpush2.msra.mxu0 0.0
    %462 = vmatprep.subr.mxu0 0.0
    %463 = vmatpush2.msra.mxu0 0.0
    %464 = vmatprep.subr.mxu0 0.0
    %465 = vmatpush2.msra.mxu0 0.0
    %466 = vmatprep.subr.mxu0 0.0
    %467 = vmatpush2.msra.mxu0 0.0
    %468 = vmatprep.subr.mxu0 0.0
    %469 = vmatpush2.msra.mxu0 0.0
    %470 = vmatprep.subr.mxu0 0.0
    %471 = vmatpush2.msra.mxu0 0.0
    %472 = vmatprep.mubr.f32.mxu0 0.0
    %473 = vmatmul.mubr.f32.gmra.mxu0 %v404
    %v474 = vpop.f32.mrf.mxu0
    %v475 = vadd.f32 0.0, %v474
    %v476 = vpop.f32.mrf.mxu0
    %477 = vmatprep.mubr.f32.mxu0 0.0
    %478 = vmatmul.mubr.f32.gmra.mxu0 %v406
    %v479 = vpop.f32.mrf.mxu0
    %v480 = vadd.f32 0.0, %v479
    %v481 = vpop.f32.mrf.mxu0
    %482 = vdwg.mxu0
    %v483 = vsel %vm403, %v220, 0
    %v485 = vsel %vm403, %v222, 0
    %487 = vmatprep.subr.mxu0 0.0
    %488 = vmatpush1.msra.mxu0 0.0
    %489 = vmatprep.subr.mxu0 0.0
    %490 = vmatpush1.msra.mxu0 0.0
    %491 = vmatprep.subr.mxu0 0.0
    %492 = vmatpush1.msra.mxu0 0.0
    %493 = vmatprep.subr.mxu0 0.0
    %494 = vmatpush1.msra.mxu0 0.0
    %495 = vmatprep.subr.mxu0 0.0
    %496 = vmatpush1.msra.mxu0 0.0
    %497 = vmatprep.subr.mxu0 0.0
    %498 = vmatpush1.msra.mxu0 0.0
    %499 = vmatprep.subr.mxu0 0.0
    %500 = vmatpush1.msra.mxu0 0.0
    %501 = vmatprep.subr.mxu0 0.0
    %502 = vmatpush1.msra.mxu0 0.0
    %503 = vmatprep.subr.mxu0 0.0
    %504 = vmatpush1.msra.mxu0 0.0
    %505 = vmatprep.subr.mxu0 0.0
    %506 = vmatpush1.msra.mxu0 0.0
    %507 = vmatprep.subr.mxu0 0.0
    %508 = vmatpush1.msra.mxu0 0.0
    %509 = vmatprep.subr.mxu0 0.0
    %510 = vmatpush1.msra.mxu0 0.0
    %511 = vmatprep.subr.mxu0 0.0
    %512 = vmatpush1.msra.mxu0 0.0
    %513 = vmatprep.subr.mxu0 0.0
    %514 = vmatpush1.msra.mxu0 0.0
    %515 = vmatprep.subr.mxu0 0.0
    %516 = vmatpush1.msra.mxu0 0.0
    %517 = vmatprep.subr.mxu0 0.0
    %518 = vmatpush1.msra.mxu0 %v323
    %519 = vmatprep.subr.mxu0 0.0
    %520 = vmatpush2.msra.mxu0 0.0
    %521 = vmatprep.subr.mxu0 0.0
    %522 = vmatpush2.msra.mxu0 0.0
    %523 = vmatprep.subr.mxu0 0.0
    %524 = vmatpush2.msra.mxu0 0.0
    %525 = vmatprep.subr.mxu0 0.0
    %526 = vmatpush2.msra.mxu0 0.0
    %527 = vmatprep.subr.mxu0 0.0
    %528 = vmatpush2.msra.mxu0 0.0
    %529 = vmatprep.subr.mxu0 0.0
    %530 = vmatpush2.msra.mxu0 0.0
    %531 = vmatprep.subr.mxu0 0.0
    %532 = vmatpush2.msra.mxu0 0.0
    %533 = vmatprep.subr.mxu0 0.0
    %534 = vmatpush2.msra.mxu0 0.0
    %535 = vmatprep.subr.mxu0 0.0
    %536 = vmatpush2.msra.mxu0 0.0
    %537 = vmatprep.subr.mxu0 0.0
    %538 = vmatpush2.msra.mxu0 0.0
    %539 = vmatprep.subr.mxu0 0.0
    %540 = vmatpush2.msra.mxu0 0.0
    %541 = vmatprep.subr.mxu0 0.0
    %542 = vmatpush2.msra.mxu0 0.0
    %543 = vmatprep.subr.mxu0 0.0
    %544 = vmatpush2.msra.mxu0 0.0
    %545 = vmatprep.subr.mxu0 0.0
    %546 = vmatpush2.msra.mxu0 0.0
    %547 = vmatprep.subr.mxu0 0.0
    %548 = vmatpush2.msra.mxu0 0.0
    %549 = vmatprep.subr.mxu0 0.0
    %550 = vmatpush2.msra.mxu0 0.0
    %551 = vmatprep.mubr.f32.mxu0 0.0
    %552 = vmatmul.mubr.f32.gmra.mxu0 %v483
    %v553 = vpop.f32.mrf.mxu0
    %v554 = vadd.f32 0.0, %v553
    %v555 = vpop.f32.mrf.mxu0
    %556 = vmatprep.mubr.f32.mxu0 0.0
    %557 = vmatmul.mubr.f32.gmra.mxu0 %v485
    %v558 = vpop.f32.mrf.mxu0
    %v559 = vadd.f32 0.0, %v558
    %v560 = vpop.f32.mrf.mxu0
    %561 = vdwg.mxu0
    %v562 = vsel %vm403, %v224, 0
    %v564 = vsel %vm403, %v226, 0
    %566 = vmatprep.subr.mxu0 0.0
    %567 = vmatpush1.msra.mxu0 0.0
    %568 = vmatprep.subr.mxu0 0.0
    %569 = vmatpush1.msra.mxu0 0.0
    %570 = vmatprep.subr.mxu0 0.0
    %571 = vmatpush1.msra.mxu0 0.0
    %572 = vmatprep.subr.mxu0 0.0
    %573 = vmatpush1.msra.mxu0 0.0
    %574 = vmatprep.subr.mxu0 0.0
    %575 = vmatpush1.msra.mxu0 0.0
    %576 = vmatprep.subr.mxu0 0.0
    %577 = vmatpush1.msra.mxu0 0.0
    %578 = vmatprep.subr.mxu0 0.0
    %579 = vmatpush1.msra.mxu0 0.0
    %580 = vmatprep.subr.mxu0 0.0
    %581 = vmatpush1.msra.mxu0 0.0
    %582 = vmatprep.subr.mxu0 0.0
    %583 = vmatpush1.msra.mxu0 0.0
    %584 = vmatprep.subr.mxu0 0.0
    %585 = vmatpush1.msra.mxu0 0.0
    %586 = vmatprep.subr.mxu0 0.0
    %587 = vmatpush1.msra.mxu0 0.0
    %588 = vmatprep.subr.mxu0 0.0
    %589 = vmatpush1.msra.mxu0 0.0
    %590 = vmatprep.subr.mxu0 0.0
    %591 = vmatpush1.msra.mxu0 0.0
    %592 = vmatprep.subr.mxu0 0.0
    %593 = vmatpush1.msra.mxu0 0.0
    %594 = vmatprep.subr.mxu0 0.0
    %595 = vmatpush1.msra.mxu0 0.0
    %596 = vmatprep.subr.mxu0 0.0
    %597 = vmatpush1.msra.mxu0 %v355
    %598 = vmatprep.subr.mxu0 0.0
    %599 = vmatpush2.msra.mxu0 0.0
    %600 = vmatprep.subr.mxu0 0.0
    %601 = vmatpush2.msra.mxu0 0.0
    %602 = vmatprep.subr.mxu0 0.0
    %603 = vmatpush2.msra.mxu0 0.0
    %604 = vmatprep.subr.mxu0 0.0
    %605 = vmatpush2.msra.mxu0 0.0
    %606 = vmatprep.subr.mxu0 0.0
    %607 = vmatpush2.msra.mxu0 0.0
    %608 = vmatprep.subr.mxu0 0.0
    %609 = vmatpush2.msra.mxu0 0.0
    %610 = vmatprep.subr.mxu0 0.0
    %611 = vmatpush2.msra.mxu0 0.0
    %612 = vmatprep.subr.mxu0 0.0
    %613 = vmatpush2.msra.mxu0 0.0
    %614 = vmatprep.subr.mxu0 0.0
    %615 = vmatpush2.msra.mxu0 0.0
    %616 = vmatprep.subr.mxu0 0.0
    %617 = vmatpush2.msra.mxu0 0.0
    %618 = vmatprep.subr.mxu0 0.0
    %619 = vmatpush2.msra.mxu0 0.0
    %620 = vmatprep.subr.mxu0 0.0
    %621 = vmatpush2.msra.mxu0 0.0
    %622 = vmatprep.subr.mxu0 0.0
    %623 = vmatpush2.msra.mxu0 0.0
    %624 = vmatprep.subr.mxu0 0.0
    %625 = vmatpush2.msra.mxu0 0.0
    %626 = vmatprep.subr.mxu0 0.0
    %627 = vmatpush2.msra.mxu0 0.0
    %628 = vmatprep.subr.mxu0 0.0
    %629 = vmatpush2.msra.mxu0 0.0
    %630 = vmatprep.mubr.f32.mxu0 0.0
    %631 = vmatmul.mubr.f32.gmra.mxu0 %v562
    %v632 = vpop.f32.mrf.mxu0
    %v633 = vadd.f32 0.0, %v632
    %v634 = vpop.f32.mrf.mxu0
    %635 = vmatprep.mubr.f32.mxu0 0.0
    %636 = vmatmul.mubr.f32.gmra.mxu0 %v564
    %v637 = vpop.f32.mrf.mxu0
    %v638 = vadd.f32 0.0, %v637
    %v639 = vpop.f32.mrf.mxu0
    %640 = vdwg.mxu0
    %v641 = vsel %vm403, %v228, 0
    %v643 = vsel %vm403, %v230, 0
    %645 = vmatprep.subr.mxu0 0.0
    %646 = vmatpush1.msra.mxu0 0.0
    %647 = vmatprep.subr.mxu0 0.0
    %648 = vmatpush1.msra.mxu0 0.0
    %649 = vmatprep.subr.mxu0 0.0
    %650 = vmatpush1.msra.mxu0 0.0
    %651 = vmatprep.subr.mxu0 0.0
    %652 = vmatpush1.msra.mxu0 0.0
    %653 = vmatprep.subr.mxu0 0.0
    %654 = vmatpush1.msra.mxu0 0.0
    %655 = vmatprep.subr.mxu0 0.0
    %656 = vmatpush1.msra.mxu0 0.0
    %657 = vmatprep.subr.mxu0 0.0
    %658 = vmatpush1.msra.mxu0 0.0
    %659 = vmatprep.subr.mxu0 0.0
    %660 = vmatpush1.msra.mxu0 0.0
    %661 = vmatprep.subr.mxu0 0.0
    %662 = vmatpush1.msra.mxu0 0.0
    %663 = vmatprep.subr.mxu0 0.0
    %664 = vmatpush1.msra.mxu0 0.0
    %665 = vmatprep.subr.mxu0 0.0
    %666 = vmatpush1.msra.mxu0 0.0
    %667 = vmatprep.subr.mxu0 0.0
    %668 = vmatpush1.msra.mxu0 0.0
    %669 = vmatprep.subr.mxu0 0.0
    %670 = vmatpush1.msra.mxu0 0.0
    %671 = vmatprep.subr.mxu0 0.0
    %672 = vmatpush1.msra.mxu0 0.0
    %673 = vmatprep.subr.mxu0 0.0
    %674 = vmatpush1.msra.mxu0 0.0
    %675 = vmatprep.subr.mxu0 0.0
    %676 = vmatpush1.msra.mxu0 %v387
    %677 = vmatprep.subr.mxu0 0.0
    %678 = vmatpush2.msra.mxu0 0.0
    %679 = vmatprep.subr.mxu0 0.0
    %680 = vmatpush2.msra.mxu0 0.0
    %681 = vmatprep.subr.mxu0 0.0
    %682 = vmatpush2.msra.mxu0 0.0
    %683 = vmatprep.subr.mxu0 0.0
    %684 = vmatpush2.msra.mxu0 0.0
    %685 = vmatprep.subr.mxu0 0.0
    %686 = vmatpush2.msra.mxu0 0.0
    %687 = vmatprep.subr.mxu0 0.0
    %688 = vmatpush2.msra.mxu0 0.0
    %689 = vmatprep.subr.mxu0 0.0
    %690 = vmatpush2.msra.mxu0 0.0
    %691 = vmatprep.subr.mxu0 0.0
    %692 = vmatpush2.msra.mxu0 0.0
    %693 = vmatprep.subr.mxu0 0.0
    %694 = vmatpush2.msra.mxu0 0.0
    %695 = vmatprep.subr.mxu0 0.0
    %696 = vmatpush2.msra.mxu0 0.0
    %697 = vmatprep.subr.mxu0 0.0
    %698 = vmatpush2.msra.mxu0 0.0
    %699 = vmatprep.subr.mxu0 0.0
    %700 = vmatpush2.msra.mxu0 0.0
    %701 = vmatprep.subr.mxu0 0.0
    %702 = vmatpush2.msra.mxu0 0.0
    %703 = vmatprep.subr.mxu0 0.0
    %704 = vmatpush2.msra.mxu0 0.0
    %705 = vmatprep.subr.mxu0 0.0
    %706 = vmatpush2.msra.mxu0 0.0
    %707 = vmatprep.subr.mxu0 0.0
    %708 = vmatpush2.msra.mxu0 0.0
    %709 = vmatprep.mubr.f32.mxu0 0.0
    %710 = vmatmul.mubr.f32.gmra.mxu0 %v641
    %v711 = vpop.f32.mrf.mxu0
    %v712 = vadd.f32 0.0, %v711
    %v713 = vpop.f32.mrf.mxu0
    %714 = vmatprep.mubr.f32.mxu0 0.0
    %715 = vmatmul.mubr.f32.gmra.mxu0 %v643
    %v716 = vpop.f32.mrf.mxu0
    %v717 = vadd.f32 0.0, %v716
    %v718 = vpop.f32.mrf.mxu0
    %719 = vdwg.mxu0
    %v720 = vlaneseq
    %v721 = vshrl.u32 %v720, 7
    %v722 = vadd.s32 %v721, 8
    %vm723 = vcmp.lt.s32.totalorder %v721, 0
    %v724 = vsub.s32 0, %v721
    %v725 = vsel %vm723, %v724, %v721
    %v726 = vshrl.u32 %v725, 1
    %v727 = vand.u32 %v725, 1
    %v728 = vsub.s32 0, %v727
    %v729 = vsel %vm723, %v728, %v727
    %vm730 = vcmp.lt.s32.totalorder %v722, 0
    %v731 = vsub.s32 0, %v722
    %v732 = vsel %vm730, %v731, %v722
    %v733 = vshrl.u32 %v732, 1
    %v734 = vand.u32 %v732, 1
    %v735 = vsub.s32 0, %v734
    %v736 = vsel %vm730, %v735, %v734
    %vm737 = vcmp.ne.s32.totalorder %v729, 0
    %vm738 = vcmp.ne.s32.totalorder %v736, 0
    %vm739 = vcmp.lt.s32.totalorder %v729, 0
    %vm740 = vcmp.lt.s32.totalorder %v736, 0
    %vm741 = vmand %vm739, %vm737
    %vm742 = vmand %vm740, %vm738
    %v743 = vadd.s32 %v729, 2
    %v744 = vadd.s32 %v736, 2
    %v745 = vsel %vm741, %v743, %v729
    %v746 = vsel %vm742, %v744, %v736
    %v747 = vlaneseq
    %v748 = vand.u32 %v747, 127
    %vm749 = vcmp.lt.s32.totalorder %v748, 0
    %v750 = vsub.s32 0, %v748
    %v751 = vsel %vm749, %v750, %v748
    %v752 = vshrl.u32 %v751, 1
    %v753 = vand.u32 %v751, 1
    %v754 = vsub.s32 0, %v753
    %v755 = vsel %vm749, %v754, %v753
    %vm756 = vcmp.ne.s32.totalorder %v755, 0
    %vm757 = vcmp.lt.s32.totalorder %v755, 0
    %vm758 = vmand %vm757, %vm756
    %v759 = vadd.s32 %v755, 2
    %v760 = vsel %vm758, %v759, %v755
    %vm761 = vcmp.eq.s32.totalorder %v745, %v760
    %vm762 = vcmp.eq.s32.totalorder %v746, %v760
    %v763 = vsel %vm761, 1, 0
    %v764 = vsel %vm762, 1, 0
    %vm765 = vcmp.eq.s32.totalorder %v763, 1
    %vm766 = vcmp.eq.s32.totalorder %v764, 1
    %v767 = vsel %vm765, %v475, -1e+30
    %v768 = vsel %vm766, %v480, -1e+30
    %v769 = vsel %vm765, %v554, -1e+30
    %v770 = vsel %vm766, %v559, -1e+30
    %v771 = vsel %vm765, %v633, -1e+30
    %v772 = vsel %vm766, %v638, -1e+30
    %v773 = vsel %vm765, %v712, -1e+30
    %v774 = vsel %vm766, %v717, -1e+30
    %vm775 = vcmask 130048
    %v776 = vsel %vm775, %v767, -inf
    %777 = vmax.xlane.f32.xlu0 %v776
    %v778 = vpop.xlane.xlu0 %777
    %v779 = vsel %vm775, %v768, -inf
    %780 = vmax.xlane.f32.xlu0 %v779
    %v781 = vpop.xlane.xlu0 %780
    %v782 = vsel %vm775, %v769, -inf
    %783 = vmax.xlane.f32.xlu0 %v782
    %v784 = vpop.xlane.xlu0 %783
    %v785 = vsel %vm775, %v770, -inf
    %786 = vmax.xlane.f32.xlu0 %v785
    %v787 = vpop.xlane.xlu0 %786
    %v788 = vsel %vm775, %v771, -inf
    %789 = vmax.xlane.f32.xlu0 %v788
    %v790 = vpop.xlane.xlu0 %789
    %v791 = vsel %vm775, %v772, -inf
    %792 = vmax.xlane.f32.xlu0 %v791
    %v793 = vpop.xlane.xlu0 %792
    %v794 = vsel %vm775, %v773, -inf
    %795 = vmax.xlane.f32.xlu0 %v794
    %v796 = vpop.xlane.xlu0 %795
    %v797 = vsel %vm775, %v774, -inf
    %798 = vmax.xlane.f32.xlu0 %v797
    %v799 = vpop.xlane.xlu0 %798
    %v800 = vsub.f32 %v767, %v778
    %v801 = vsub.f32 %v768, %v781
    %v802 = vsub.f32 %v769, %v784
    %v803 = vsub.f32 %v770, %v787
    %v804 = vsub.f32 %v771, %v790
    %v805 = vsub.f32 %v772, %v793
    %v806 = vsub.f32 %v773, %v796
    %v807 = vsub.f32 %v774, %v799
    %v808 = vmul.f32 %v800, 1.442695
    %v809 = vpow.pop %v808
    %v810 = vmul.f32 %v801, 1.442695
    %v811 = vpow.pop %v810
    %v812 = vmul.f32 %v802, 1.442695
    %v813 = vpow.pop %v812
    %v814 = vmul.f32 %v803, 1.442695
    %v815 = vpow.pop %v814
    %v816 = vmul.f32 %v804, 1.442695
    %v817 = vpow.pop %v816
    %v818 = vmul.f32 %v805, 1.442695
    %v819 = vpow.pop %v818
    %v820 = vmul.f32 %v806, 1.442695
    %v821 = vpow.pop %v820
    %v822 = vmul.f32 %v807, 1.442695
    %v823 = vpow.pop %v822
    %v824 = vsel %vm775, %v809, 0.0
    %825 = vadd.xlane.f32.xlu0 %v824
    %v826 = vpop.xlane.xlu0 %825
    %v827 = vsel %vm775, %v811, 0.0
    %828 = vadd.xlane.f32.xlu0 %v827
    %v829 = vpop.xlane.xlu0 %828
    %v830 = vsel %vm775, %v813, 0.0
    %831 = vadd.xlane.f32.xlu0 %v830
    %v832 = vpop.xlane.xlu0 %831
    %v833 = vsel %vm775, %v815, 0.0
    %834 = vadd.xlane.f32.xlu0 %v833
    %v835 = vpop.xlane.xlu0 %834
    %v836 = vsel %vm775, %v817, 0.0
    %837 = vadd.xlane.f32.xlu0 %v836
    %v838 = vpop.xlane.xlu0 %837
    %v839 = vsel %vm775, %v819, 0.0
    %840 = vadd.xlane.f32.xlu0 %v839
    %v841 = vpop.xlane.xlu0 %840
    %v842 = vsel %vm775, %v821, 0.0
    %843 = vadd.xlane.f32.xlu0 %v842
    %v844 = vpop.xlane.xlu0 %843
    %v845 = vsel %vm775, %v823, 0.0
    %846 = vadd.xlane.f32.xlu0 %v845
    %v847 = vpop.xlane.xlu0 %846
    %v848 = vrcp.pop %v826
    %v849 = vrcp.pop %v829
    %v850 = vrcp.pop %v832
    %v851 = vrcp.pop %v835
    %v852 = vrcp.pop %v838
    %v853 = vrcp.pop %v841
    %v854 = vrcp.pop %v844
    %v855 = vrcp.pop %v847
    %v856 = vmul.f32 %v809, %v848
    %v857 = vmul.f32 %v811, %v849
    %v858 = vmul.f32 %v813, %v850
    %v859 = vmul.f32 %v815, %v851
    %v860 = vmul.f32 %v817, %v852
    %v861 = vmul.f32 %v819, %v853
    %v862 = vmul.f32 %v821, %v854
    %v863 = vmul.f32 %v823, %v855
    %864 = vxpose.xlu0.b32.start [1/16] %v209, 128
    %865 = vxpose.xlu0.b32.cont [2/16] %v214, 128
    %866 = vxpose.xlu0.b32.cont [3/16] 0.0, 128
    %867 = vxpose.xlu0.b32.cont [4/16] 0.0, 128
    %868 = vxpose.xlu0.b32.cont [5/16] 0.0, 128
    %869 = vxpose.xlu0.b32.cont [6/16] 0.0, 128
    %870 = vxpose.xlu0.b32.cont [7/16] 0.0, 128
    %871 = vxpose.xlu0.b32.cont [8/16] 0.0, 128
    %872 = vxpose.xlu0.b32.cont [9/16] 0.0, 128
    %873 = vxpose.xlu0.b32.cont [10/16] 0.0, 128
    %874 = vxpose.xlu0.b32.cont [11/16] 0.0, 128
    %875 = vxpose.xlu0.b32.cont [12/16] 0.0, 128
    %876 = vxpose.xlu0.b32.cont [13/16] 0.0, 128
    %877 = vxpose.xlu0.b32.cont [14/16] 0.0, 128
    %878 = vxpose.xlu0.b32.cont [15/16] 0.0, 128
    %879 = vxpose.xlu0.b32.end [16/16] 0.0, 128
    %v880 = vpop.trf.xlu0
    %v881 = vpop.trf.xlu0
    %v882 = vpop.trf.xlu0
    %v883 = vpop.trf.xlu0
    %v884 = vpop.trf.xlu0
    %v885 = vpop.trf.xlu0
    %v886 = vpop.trf.xlu0
    %v887 = vpop.trf.xlu0
    %v888 = vpop.trf.xlu0
    %v889 = vpop.trf.xlu0
    %v890 = vpop.trf.xlu0
    %v891 = vpop.trf.xlu0
    %v892 = vpop.trf.xlu0
    %v893 = vpop.trf.xlu0
    %v894 = vpop.trf.xlu0
    %v895 = vpop.trf.xlu0
    %896 = vxpose.xlu0.b32.start [1/16] %v234, 128
    %897 = vxpose.xlu0.b32.cont [2/16] %v236, 128
    %898 = vxpose.xlu0.b32.cont [3/16] 0.0, 128
    %899 = vxpose.xlu0.b32.cont [4/16] 0.0, 128
    %900 = vxpose.xlu0.b32.cont [5/16] 0.0, 128
    %901 = vxpose.xlu0.b32.cont [6/16] 0.0, 128
    %902 = vxpose.xlu0.b32.cont [7/16] 0.0, 128
    %903 = vxpose.xlu0.b32.cont [8/16] 0.0, 128
    %904 = vxpose.xlu0.b32.cont [9/16] 0.0, 128
    %905 = vxpose.xlu0.b32.cont [10/16] 0.0, 128
    %906 = vxpose.xlu0.b32.cont [11/16] 0.0, 128
    %907 = vxpose.xlu0.b32.cont [12/16] 0.0, 128
    %908 = vxpose.xlu0.b32.cont [13/16] 0.0, 128
    %909 = vxpose.xlu0.b32.cont [14/16] 0.0, 128
    %910 = vxpose.xlu0.b32.cont [15/16] 0.0, 128
    %911 = vxpose.xlu0.b32.end [16/16] 0.0, 128
    %v912 = vpop.trf.xlu0
    %v913 = vpop.trf.xlu0
    %v914 = vpop.trf.xlu0
    %v915 = vpop.trf.xlu0
    %v916 = vpop.trf.xlu0
    %v917 = vpop.trf.xlu0
    %v918 = vpop.trf.xlu0
    %v919 = vpop.trf.xlu0
    %v920 = vpop.trf.xlu0
    %v921 = vpop.trf.xlu0
    %v922 = vpop.trf.xlu0
    %v923 = vpop.trf.xlu0
    %v924 = vpop.trf.xlu0
    %v925 = vpop.trf.xlu0
    %v926 = vpop.trf.xlu0
    %v927 = vpop.trf.xlu0
    %928 = vxpose.xlu0.b32.start [1/16] %v240, 128
    %929 = vxpose.xlu0.b32.cont [2/16] %v242, 128
    %930 = vxpose.xlu0.b32.cont [3/16] 0.0, 128
    %931 = vxpose.xlu0.b32.cont [4/16] 0.0, 128
    %932 = vxpose.xlu0.b32.cont [5/16] 0.0, 128
    %933 = vxpose.xlu0.b32.cont [6/16] 0.0, 128
    %934 = vxpose.xlu0.b32.cont [7/16] 0.0, 128
    %935 = vxpose.xlu0.b32.cont [8/16] 0.0, 128
    %936 = vxpose.xlu0.b32.cont [9/16] 0.0, 128
    %937 = vxpose.xlu0.b32.cont [10/16] 0.0, 128
    %938 = vxpose.xlu0.b32.cont [11/16] 0.0, 128
    %939 = vxpose.xlu0.b32.cont [12/16] 0.0, 128
    %940 = vxpose.xlu0.b32.cont [13/16] 0.0, 128
    %941 = vxpose.xlu0.b32.cont [14/16] 0.0, 128
    %942 = vxpose.xlu0.b32.cont [15/16] 0.0, 128
    %943 = vxpose.xlu0.b32.end [16/16] 0.0, 128
    %v944 = vpop.trf.xlu0
    %v945 = vpop.trf.xlu0
    %v946 = vpop.trf.xlu0
    %v947 = vpop.trf.xlu0
    %v948 = vpop.trf.xlu0
    %v949 = vpop.trf.xlu0
    %v950 = vpop.trf.xlu0
    %v951 = vpop.trf.xlu0
    %v952 = vpop.trf.xlu0
    %v953 = vpop.trf.xlu0
    %v954 = vpop.trf.xlu0
    %v955 = vpop.trf.xlu0
    %v956 = vpop.trf.xlu0
    %v957 = vpop.trf.xlu0
    %v958 = vpop.trf.xlu0
    %v959 = vpop.trf.xlu0
    %960 = vxpose.xlu0.b32.start [1/16] %v246, 128
    %961 = vxpose.xlu0.b32.cont [2/16] %v248, 128
    %962 = vxpose.xlu0.b32.cont [3/16] 0.0, 128
    %963 = vxpose.xlu0.b32.cont [4/16] 0.0, 128
    %964 = vxpose.xlu0.b32.cont [5/16] 0.0, 128
    %965 = vxpose.xlu0.b32.cont [6/16] 0.0, 128
    %966 = vxpose.xlu0.b32.cont [7/16] 0.0, 128
    %967 = vxpose.xlu0.b32.cont [8/16] 0.0, 128
    %968 = vxpose.xlu0.b32.cont [9/16] 0.0, 128
    %969 = vxpose.xlu0.b32.cont [10/16] 0.0, 128
    %970 = vxpose.xlu0.b32.cont [11/16] 0.0, 128
    %971 = vxpose.xlu0.b32.cont [12/16] 0.0, 128
    %972 = vxpose.xlu0.b32.cont [13/16] 0.0, 128
    %973 = vxpose.xlu0.b32.cont [14/16] 0.0, 128
    %974 = vxpose.xlu0.b32.cont [15/16] 0.0, 128
    %975 = vxpose.xlu0.b32.end [16/16] 0.0, 128
    %v976 = vpop.trf.xlu0
    %v977 = vpop.trf.xlu0
    %v978 = vpop.trf.xlu0
    %v979 = vpop.trf.xlu0
    %v980 = vpop.trf.xlu0
    %v981 = vpop.trf.xlu0
    %v982 = vpop.trf.xlu0
    %v983 = vpop.trf.xlu0
    %v984 = vpop.trf.xlu0
    %v985 = vpop.trf.xlu0
    %v986 = vpop.trf.xlu0
    %v987 = vpop.trf.xlu0
    %v988 = vpop.trf.xlu0
    %v989 = vpop.trf.xlu0
    %v990 = vpop.trf.xlu0
    %v991 = vpop.trf.xlu0
    %v993 = vsel %vm775, %v880, 0
    %v996 = vsel %vm775, %v856, 0
    %v999 = vsel %vm775, %v857, 0
    %1001 = vmatprep.subr.mxu0 0.0
    %1002 = vmatpush1.xpose.msra.mxu0 0.0
    %1003 = vmatprep.subr.mxu0 0.0
    %1004 = vmatpush1.xpose.msra.mxu0 0.0
    %1005 = vmatprep.subr.mxu0 0.0
    %1006 = vmatpush1.xpose.msra.mxu0 0.0
    %1007 = vmatprep.subr.mxu0 0.0
    %1008 = vmatpush1.xpose.msra.mxu0 0.0
    %1009 = vmatprep.subr.mxu0 0.0
    %1010 = vmatpush1.xpose.msra.mxu0 0.0
    %1011 = vmatprep.subr.mxu0 0.0
    %1012 = vmatpush1.xpose.msra.mxu0 0.0
    %1013 = vmatprep.subr.mxu0 0.0
    %1014 = vmatpush1.xpose.msra.mxu0 0.0
    %1015 = vmatprep.subr.mxu0 0.0
    %1016 = vmatpush1.xpose.msra.mxu0 0.0
    %1017 = vmatprep.subr.mxu0 0.0
    %1018 = vmatpush1.xpose.msra.mxu0 0.0
    %1019 = vmatprep.subr.mxu0 0.0
    %1020 = vmatpush1.xpose.msra.mxu0 0.0
    %1021 = vmatprep.subr.mxu0 0.0
    %1022 = vmatpush1.xpose.msra.mxu0 0.0
    %1023 = vmatprep.subr.mxu0 0.0
    %1024 = vmatpush1.xpose.msra.mxu0 0.0
    %1025 = vmatprep.subr.mxu0 0.0
    %1026 = vmatpush1.xpose.msra.mxu0 0.0
    %1027 = vmatprep.subr.mxu0 0.0
    %1028 = vmatpush1.xpose.msra.mxu0 0.0
    %1029 = vmatprep.subr.mxu0 0.0
    %1030 = vmatpush1.xpose.msra.mxu0 %v999
    %1031 = vmatprep.subr.mxu0 0.0
    %1032 = vmatpush1.xpose.msra.mxu0 %v996
    %1033 = vmatprep.subr.mxu0 0.0
    %1034 = vmatpush2.xpose.msra.mxu0 0.0
    %1035 = vmatprep.subr.mxu0 0.0
    %1036 = vmatpush2.xpose.msra.mxu0 0.0
    %1037 = vmatprep.subr.mxu0 0.0
    %1038 = vmatpush2.xpose.msra.mxu0 0.0
    %1039 = vmatprep.subr.mxu0 0.0
    %1040 = vmatpush2.xpose.msra.mxu0 0.0
    %1041 = vmatprep.subr.mxu0 0.0
    %1042 = vmatpush2.xpose.msra.mxu0 0.0
    %1043 = vmatprep.subr.mxu0 0.0
    %1044 = vmatpush2.xpose.msra.mxu0 0.0
    %1045 = vmatprep.subr.mxu0 0.0
    %1046 = vmatpush2.xpose.msra.mxu0 0.0
    %1047 = vmatprep.subr.mxu0 0.0
    %1048 = vmatpush2.xpose.msra.mxu0 0.0
    %1049 = vmatprep.subr.mxu0 0.0
    %1050 = vmatpush2.xpose.msra.mxu0 0.0
    %1051 = vmatprep.subr.mxu0 0.0
    %1052 = vmatpush2.xpose.msra.mxu0 0.0
    %1053 = vmatprep.subr.mxu0 0.0
    %1054 = vmatpush2.xpose.msra.mxu0 0.0
    %1055 = vmatprep.subr.mxu0 0.0
    %1056 = vmatpush2.xpose.msra.mxu0 0.0
    %1057 = vmatprep.subr.mxu0 0.0
    %1058 = vmatpush2.xpose.msra.mxu0 0.0
    %1059 = vmatprep.subr.mxu0 0.0
    %1060 = vmatpush2.xpose.msra.mxu0 0.0
    %1061 = vmatprep.subr.mxu0 0.0
    %1062 = vmatpush2.xpose.msra.mxu0 0.0
    %1063 = vmatprep.subr.mxu0 0.0
    %1064 = vmatpush2.xpose.msra.mxu0 0.0
    %1065 = vmatprep.mubr.f32.mxu0 0.0
    %1066 = vmatmul.mubr.f32.gmra.mxu0 %v993
    %v1067 = vpop.f32.mrf.mxu0
    %v1068 = vadd.f32 0.0, %v1067
    %v1069 = vpop.f32.mrf.mxu0
    %1070 = vdwg.mxu0
    %v1072 = vsel %vm775, %v912, 0
    %v1075 = vsel %vm775, %v858, 0
    %v1078 = vsel %vm775, %v859, 0
    %1080 = vmatprep.subr.mxu0 0.0
    %1081 = vmatpush1.xpose.msra.mxu0 0.0
    %1082 = vmatprep.subr.mxu0 0.0
    %1083 = vmatpush1.xpose.msra.mxu0 0.0
    %1084 = vmatprep.subr.mxu0 0.0
    %1085 = vmatpush1.xpose.msra.mxu0 0.0
    %1086 = vmatprep.subr.mxu0 0.0
    %1087 = vmatpush1.xpose.msra.mxu0 0.0
    %1088 = vmatprep.subr.mxu0 0.0
    %1089 = vmatpush1.xpose.msra.mxu0 0.0
    %1090 = vmatprep.subr.mxu0 0.0
    %1091 = vmatpush1.xpose.msra.mxu0 0.0
    %1092 = vmatprep.subr.mxu0 0.0
    %1093 = vmatpush1.xpose.msra.mxu0 0.0
    %1094 = vmatprep.subr.mxu0 0.0
    %1095 = vmatpush1.xpose.msra.mxu0 0.0
    %1096 = vmatprep.subr.mxu0 0.0
    %1097 = vmatpush1.xpose.msra.mxu0 0.0
    %1098 = vmatprep.subr.mxu0 0.0
    %1099 = vmatpush1.xpose.msra.mxu0 0.0
    %1100 = vmatprep.subr.mxu0 0.0
    %1101 = vmatpush1.xpose.msra.mxu0 0.0
    %1102 = vmatprep.subr.mxu0 0.0
    %1103 = vmatpush1.xpose.msra.mxu0 0.0
    %1104 = vmatprep.subr.mxu0 0.0
    %1105 = vmatpush1.xpose.msra.mxu0 0.0
    %1106 = vmatprep.subr.mxu0 0.0
    %1107 = vmatpush1.xpose.msra.mxu0 0.0
    %1108 = vmatprep.subr.mxu0 0.0
    %1109 = vmatpush1.xpose.msra.mxu0 %v1078
    %1110 = vmatprep.subr.mxu0 0.0
    %1111 = vmatpush1.xpose.msra.mxu0 %v1075
    %1112 = vmatprep.subr.mxu0 0.0
    %1113 = vmatpush2.xpose.msra.mxu0 0.0
    %1114 = vmatprep.subr.mxu0 0.0
    %1115 = vmatpush2.xpose.msra.mxu0 0.0
    %1116 = vmatprep.subr.mxu0 0.0
    %1117 = vmatpush2.xpose.msra.mxu0 0.0
    %1118 = vmatprep.subr.mxu0 0.0
    %1119 = vmatpush2.xpose.msra.mxu0 0.0
    %1120 = vmatprep.subr.mxu0 0.0
    %1121 = vmatpush2.xpose.msra.mxu0 0.0
    %1122 = vmatprep.subr.mxu0 0.0
    %1123 = vmatpush2.xpose.msra.mxu0 0.0
    %1124 = vmatprep.subr.mxu0 0.0
    %1125 = vmatpush2.xpose.msra.mxu0 0.0
    %1126 = vmatprep.subr.mxu0 0.0
    %1127 = vmatpush2.xpose.msra.mxu0 0.0
    %1128 = vmatprep.subr.mxu0 0.0
    %1129 = vmatpush2.xpose.msra.mxu0 0.0
    %1130 = vmatprep.subr.mxu0 0.0
    %1131 = vmatpush2.xpose.msra.mxu0 0.0
    %1132 = vmatprep.subr.mxu0 0.0
    %1133 = vmatpush2.xpose.msra.mxu0 0.0
    %1134 = vmatprep.subr.mxu0 0.0
    %1135 = vmatpush2.xpose.msra.mxu0 0.0
    %1136 = vmatprep.subr.mxu0 0.0
    %1137 = vmatpush2.xpose.msra.mxu0 0.0
    %1138 = vmatprep.subr.mxu0 0.0
    %1139 = vmatpush2.xpose.msra.mxu0 0.0
    %1140 = vmatprep.subr.mxu0 0.0
    %1141 = vmatpush2.xpose.msra.mxu0 0.0
    %1142 = vmatprep.subr.mxu0 0.0
    %1143 = vmatpush2.xpose.msra.mxu0 0.0
    %1144 = vmatprep.mubr.f32.mxu0 0.0
    %1145 = vmatmul.mubr.f32.gmra.mxu0 %v1072
    %v1146 = vpop.f32.mrf.mxu0
    %v1147 = vadd.f32 0.0, %v1146
    %v1148 = vpop.f32.mrf.mxu0
    %1149 = vdwg.mxu0
    %v1151 = vsel %vm775, %v944, 0
    %v1154 = vsel %vm775, %v860, 0
    %v1157 = vsel %vm775, %v861, 0
    %1159 = vmatprep.subr.mxu0 0.0
    %1160 = vmatpush1.xpose.msra.mxu0 0.0
    %1161 = vmatprep.subr.mxu0 0.0
    %1162 = vmatpush1.xpose.msra.mxu0 0.0
    %1163 = vmatprep.subr.mxu0 0.0
    %1164 = vmatpush1.xpose.msra.mxu0 0.0
    %1165 = vmatprep.subr.mxu0 0.0
    %1166 = vmatpush1.xpose.msra.mxu0 0.0
    %1167 = vmatprep.subr.mxu0 0.0
    %1168 = vmatpush1.xpose.msra.mxu0 0.0
    %1169 = vmatprep.subr.mxu0 0.0
    %1170 = vmatpush1.xpose.msra.mxu0 0.0
    %1171 = vmatprep.subr.mxu0 0.0
    %1172 = vmatpush1.xpose.msra.mxu0 0.0
    %1173 = vmatprep.subr.mxu0 0.0
    %1174 = vmatpush1.xpose.msra.mxu0 0.0
    %1175 = vmatprep.subr.mxu0 0.0
    %1176 = vmatpush1.xpose.msra.mxu0 0.0
    %1177 = vmatprep.subr.mxu0 0.0
    %1178 = vmatpush1.xpose.msra.mxu0 0.0
    %1179 = vmatprep.subr.mxu0 0.0
    %1180 = vmatpush1.xpose.msra.mxu0 0.0
    %1181 = vmatprep.subr.mxu0 0.0
    %1182 = vmatpush1.xpose.msra.mxu0 0.0
    %1183 = vmatprep.subr.mxu0 0.0
    %1184 = vmatpush1.xpose.msra.mxu0 0.0
    %1185 = vmatprep.subr.mxu0 0.0
    %1186 = vmatpush1.xpose.msra.mxu0 0.0
    %1187 = vmatprep.subr.mxu0 0.0
    %1188 = vmatpush1.xpose.msra.mxu0 %v1157
    %1189 = vmatprep.subr.mxu0 0.0
    %1190 = vmatpush1.xpose.msra.mxu0 %v1154
    %1191 = vmatprep.subr.mxu0 0.0
    %1192 = vmatpush2.xpose.msra.mxu0 0.0
    %1193 = vmatprep.subr.mxu0 0.0
    %1194 = vmatpush2.xpose.msra.mxu0 0.0
    %1195 = vmatprep.subr.mxu0 0.0
    %1196 = vmatpush2.xpose.msra.mxu0 0.0
    %1197 = vmatprep.subr.mxu0 0.0
    %1198 = vmatpush2.xpose.msra.mxu0 0.0
    %1199 = vmatprep.subr.mxu0 0.0
    %1200 = vmatpush2.xpose.msra.mxu0 0.0
    %1201 = vmatprep.subr.mxu0 0.0
    %1202 = vmatpush2.xpose.msra.mxu0 0.0
    %1203 = vmatprep.subr.mxu0 0.0
    %1204 = vmatpush2.xpose.msra.mxu0 0.0
    %1205 = vmatprep.subr.mxu0 0.0
    %1206 = vmatpush2.xpose.msra.mxu0 0.0
    %1207 = vmatprep.subr.mxu0 0.0
    %1208 = vmatpush2.xpose.msra.mxu0 0.0
    %1209 = vmatprep.subr.mxu0 0.0
    %1210 = vmatpush2.xpose.msra.mxu0 0.0
    %1211 = vmatprep.subr.mxu0 0.0
    %1212 = vmatpush2.xpose.msra.mxu0 0.0
    %1213 = vmatprep.subr.mxu0 0.0
    %1214 = vmatpush2.xpose.msra.mxu0 0.0
    %1215 = vmatprep.subr.mxu0 0.0
    %1216 = vmatpush2.xpose.msra.mxu0 0.0
    %1217 = vmatprep.subr.mxu0 0.0
    %1218 = vmatpush2.xpose.msra.mxu0 0.0
    %1219 = vmatprep.subr.mxu0 0.0
    %1220 = vmatpush2.xpose.msra.mxu0 0.0
    %1221 = vmatprep.subr.mxu0 0.0
    %1222 = vmatpush2.xpose.msra.mxu0 0.0
    %1223 = vmatprep.mubr.f32.mxu0 0.0
    %1224 = vmatmul.mubr.f32.gmra.mxu0 %v1151
    %v1225 = vpop.f32.mrf.mxu0
    %v1226 = vadd.f32 0.0, %v1225
    %v1227 = vpop.f32.mrf.mxu0
    %1228 = vdwg.mxu0
    %v1230 = vsel %vm775, %v976, 0
    %v1233 = vsel %vm775, %v862, 0
    %v1236 = vsel %vm775, %v863, 0
    %1238 = vmatprep.subr.mxu0 0.0
    %1239 = vmatpush1.xpose.msra.mxu0 0.0
    %1240 = vmatprep.subr.mxu0 0.0
    %1241 = vmatpush1.xpose.msra.mxu0 0.0
    %1242 = vmatprep.subr.mxu0 0.0
    %1243 = vmatpush1.xpose.msra.mxu0 0.0
    %1244 = vmatprep.subr.mxu0 0.0
    %1245 = vmatpush1.xpose.msra.mxu0 0.0
    %1246 = vmatprep.subr.mxu0 0.0
    %1247 = vmatpush1.xpose.msra.mxu0 0.0
    %1248 = vmatprep.subr.mxu0 0.0
    %1249 = vmatpush1.xpose.msra.mxu0 0.0
    %1250 = vmatprep.subr.mxu0 0.0
    %1251 = vmatpush1.xpose.msra.mxu0 0.0
    %1252 = vmatprep.subr.mxu0 0.0
    %1253 = vmatpush1.xpose.msra.mxu0 0.0
    %1254 = vmatprep.subr.mxu0 0.0
    %1255 = vmatpush1.xpose.msra.mxu0 0.0
    %1256 = vmatprep.subr.mxu0 0.0
    %1257 = vmatpush1.xpose.msra.mxu0 0.0
    %1258 = vmatprep.subr.mxu0 0.0
    %1259 = vmatpush1.xpose.msra.mxu0 0.0
    %1260 = vmatprep.subr.mxu0 0.0
    %1261 = vmatpush1.xpose.msra.mxu0 0.0
    %1262 = vmatprep.subr.mxu0 0.0
    %1263 = vmatpush1.xpose.msra.mxu0 0.0
    %1264 = vmatprep.subr.mxu0 0.0
    %1265 = vmatpush1.xpose.msra.mxu0 0.0
    %1266 = vmatprep.subr.mxu0 0.0
    %1267 = vmatpush1.xpose.msra.mxu0 %v1236
    %1268 = vmatprep.subr.mxu0 0.0
    %1269 = vmatpush1.xpose.msra.mxu0 %v1233
    %1270 = vmatprep.subr.mxu0 0.0
    %1271 = vmatpush2.xpose.msra.mxu0 0.0
    %1272 = vmatprep.subr.mxu0 0.0
    %1273 = vmatpush2.xpose.msra.mxu0 0.0
    %1274 = vmatprep.subr.mxu0 0.0
    %1275 = vmatpush2.xpose.msra.mxu0 0.0
    %1276 = vmatprep.subr.mxu0 0.0
    %1277 = vmatpush2.xpose.msra.mxu0 0.0
    %1278 = vmatprep.subr.mxu0 0.0
    %1279 = vmatpush2.xpose.msra.mxu0 0.0
    %1280 = vmatprep.subr.mxu0 0.0
    %1281 = vmatpush2.xpose.msra.mxu0 0.0
    %1282 = vmatprep.subr.mxu0 0.0
    %1283 = vmatpush2.xpose.msra.mxu0 0.0
    %1284 = vmatprep.subr.mxu0 0.0
    %1285 = vmatpush2.xpose.msra.mxu0 0.0
    %1286 = vmatprep.subr.mxu0 0.0
    %1287 = vmatpush2.xpose.msra.mxu0 0.0
    %1288 = vmatprep.subr.mxu0 0.0
    %1289 = vmatpush2.xpose.msra.mxu0 0.0
    %1290 = vmatprep.subr.mxu0 0.0
    %1291 = vmatpush2.xpose.msra.mxu0 0.0
    %1292 = vmatprep.subr.mxu0 0.0
    %1293 = vmatpush2.xpose.msra.mxu0 0.0
    %1294 = vmatprep.subr.mxu0 0.0
    %1295 = vmatpush2.xpose.msra.mxu0 0.0
    %1296 = vmatprep.subr.mxu0 0.0
    %1297 = vmatpush2.xpose.msra.mxu0 0.0
    %1298 = vmatprep.subr.mxu0 0.0
    %1299 = vmatpush2.xpose.msra.mxu0 0.0
    %1300 = vmatprep.subr.mxu0 0.0
    %1301 = vmatpush2.xpose.msra.mxu0 0.0
    %1302 = vmatprep.mubr.f32.mxu0 0.0
    %1303 = vmatmul.mubr.f32.gmra.mxu0 %v1230
    %v1304 = vpop.f32.mrf.mxu0
    %v1305 = vadd.f32 0.0, %v1304
    %v1306 = vpop.f32.mrf.mxu0
    %1307 = vdwg.mxu0
    %1308 = vxpose.xlu0.b32.start [1/16] %v1068, 128
    %1309 = vxpose.xlu0.b32.cont [2/16] 0.0, 128
    %1310 = vxpose.xlu0.b32.cont [3/16] 0.0, 128
    %1311 = vxpose.xlu0.b32.cont [4/16] 0.0, 128
    %1312 = vxpose.xlu0.b32.cont [5/16] 0.0, 128
    %1313 = vxpose.xlu0.b32.cont [6/16] 0.0, 128
    %1314 = vxpose.xlu0.b32.cont [7/16] 0.0, 128
    %1315 = vxpose.xlu0.b32.cont [8/16] 0.0, 128
    %1316 = vxpose.xlu0.b32.cont [9/16] 0.0, 128
    %1317 = vxpose.xlu0.b32.cont [10/16] 0.0, 128
    %1318 = vxpose.xlu0.b32.cont [11/16] 0.0, 128
    %1319 = vxpose.xlu0.b32.cont [12/16] 0.0, 128
    %1320 = vxpose.xlu0.b32.cont [13/16] 0.0, 128
    %1321 = vxpose.xlu0.b32.cont [14/16] 0.0, 128
    %1322 = vxpose.xlu0.b32.cont [15/16] 0.0, 128
    %1323 = vxpose.xlu0.b32.end [16/16] 0.0, 128
    %v1324 = vpop.trf.xlu0
    %v1325 = vpop.trf.xlu0
    %v1326 = vpop.trf.xlu0
    %v1327 = vpop.trf.xlu0
    %v1328 = vpop.trf.xlu0
    %v1329 = vpop.trf.xlu0
    %v1330 = vpop.trf.xlu0
    %v1331 = vpop.trf.xlu0
    %v1332 = vpop.trf.xlu0
    %v1333 = vpop.trf.xlu0
    %v1334 = vpop.trf.xlu0
    %v1335 = vpop.trf.xlu0
    %v1336 = vpop.trf.xlu0
    %v1337 = vpop.trf.xlu0
    %v1338 = vpop.trf.xlu0
    %v1339 = vpop.trf.xlu0
    %1340 = vxpose.xlu0.b32.start [1/16] %v1147, 128
    %1341 = vxpose.xlu0.b32.cont [2/16] 0.0, 128
    %1342 = vxpose.xlu0.b32.cont [3/16] 0.0, 128
    %1343 = vxpose.xlu0.b32.cont [4/16] 0.0, 128
    %1344 = vxpose.xlu0.b32.cont [5/16] 0.0, 128
    %1345 = vxpose.xlu0.b32.cont [6/16] 0.0, 128
    %1346 = vxpose.xlu0.b32.cont [7/16] 0.0, 128
    %1347 = vxpose.xlu0.b32.cont [8/16] 0.0, 128
    %1348 = vxpose.xlu0.b32.cont [9/16] 0.0, 128
    %1349 = vxpose.xlu0.b32.cont [10/16] 0.0, 128
    %1350 = vxpose.xlu0.b32.cont [11/16] 0.0, 128
    %1351 = vxpose.xlu0.b32.cont [12/16] 0.0, 128
    %1352 = vxpose.xlu0.b32.cont [13/16] 0.0, 128
    %1353 = vxpose.xlu0.b32.cont [14/16] 0.0, 128
    %1354 = vxpose.xlu0.b32.cont [15/16] 0.0, 128
    %1355 = vxpose.xlu0.b32.end [16/16] 0.0, 128
    %v1356 = vpop.trf.xlu0
    %v1357 = vpop.trf.xlu0
    %v1358 = vpop.trf.xlu0
    %v1359 = vpop.trf.xlu0
    %v1360 = vpop.trf.xlu0
    %v1361 = vpop.trf.xlu0
    %v1362 = vpop.trf.xlu0
    %v1363 = vpop.trf.xlu0
    %v1364 = vpop.trf.xlu0
    %v1365 = vpop.trf.xlu0
    %v1366 = vpop.trf.xlu0
    %v1367 = vpop.trf.xlu0
    %v1368 = vpop.trf.xlu0
    %v1369 = vpop.trf.xlu0
    %v1370 = vpop.trf.xlu0
    %v1371 = vpop.trf.xlu0
    %1372 = vxpose.xlu0.b32.start [1/16] %v1226, 128
    %1373 = vxpose.xlu0.b32.cont [2/16] 0.0, 128
    %1374 = vxpose.xlu0.b32.cont [3/16] 0.0, 128
    %1375 = vxpose.xlu0.b32.cont [4/16] 0.0, 128
    %1376 = vxpose.xlu0.b32.cont [5/16] 0.0, 128
    %1377 = vxpose.xlu0.b32.cont [6/16] 0.0, 128
    %1378 = vxpose.xlu0.b32.cont [7/16] 0.0, 128
    %1379 = vxpose.xlu0.b32.cont [8/16] 0.0, 128
    %1380 = vxpose.xlu0.b32.cont [9/16] 0.0, 128
    %1381 = vxpose.xlu0.b32.cont [10/16] 0.0, 128
    %1382 = vxpose.xlu0.b32.cont [11/16] 0.0, 128
    %1383 = vxpose.xlu0.b32.cont [12/16] 0.0, 128
    %1384 = vxpose.xlu0.b32.cont [13/16] 0.0, 128
    %1385 = vxpose.xlu0.b32.cont [14/16] 0.0, 128
    %1386 = vxpose.xlu0.b32.cont [15/16] 0.0, 128
    %1387 = vxpose.xlu0.b32.end [16/16] 0.0, 128
    %v1388 = vpop.trf.xlu0
    %v1389 = vpop.trf.xlu0
    %v1390 = vpop.trf.xlu0
    %v1391 = vpop.trf.xlu0
    %v1392 = vpop.trf.xlu0
    %v1393 = vpop.trf.xlu0
    %v1394 = vpop.trf.xlu0
    %v1395 = vpop.trf.xlu0
    %v1396 = vpop.trf.xlu0
    %v1397 = vpop.trf.xlu0
    %v1398 = vpop.trf.xlu0
    %v1399 = vpop.trf.xlu0
    %v1400 = vpop.trf.xlu0
    %v1401 = vpop.trf.xlu0
    %v1402 = vpop.trf.xlu0
    %v1403 = vpop.trf.xlu0
    %1404 = vxpose.xlu0.b32.start [1/16] %v1305, 128
    %1405 = vxpose.xlu0.b32.cont [2/16] 0.0, 128
    %1406 = vxpose.xlu0.b32.cont [3/16] 0.0, 128
    %1407 = vxpose.xlu0.b32.cont [4/16] 0.0, 128
    %1408 = vxpose.xlu0.b32.cont [5/16] 0.0, 128
    %1409 = vxpose.xlu0.b32.cont [6/16] 0.0, 128
    %1410 = vxpose.xlu0.b32.cont [7/16] 0.0, 128
    %1411 = vxpose.xlu0.b32.cont [8/16] 0.0, 128
    %1412 = vxpose.xlu0.b32.cont [9/16] 0.0, 128
    %1413 = vxpose.xlu0.b32.cont [10/16] 0.0, 128
    %1414 = vxpose.xlu0.b32.cont [11/16] 0.0, 128
    %1415 = vxpose.xlu0.b32.cont [12/16] 0.0, 128
    %1416 = vxpose.xlu0.b32.cont [13/16] 0.0, 128
    %1417 = vxpose.xlu0.b32.cont [14/16] 0.0, 128
    %1418 = vxpose.xlu0.b32.cont [15/16] 0.0, 128
    %1419 = vxpose.xlu0.b32.end [16/16] 0.0, 128
    %v1420 = vpop.trf.xlu0
    %v1421 = vpop.trf.xlu0
    %v1422 = vpop.trf.xlu0
    %v1423 = vpop.trf.xlu0
    %v1424 = vpop.trf.xlu0
    %v1425 = vpop.trf.xlu0
    %v1426 = vpop.trf.xlu0
    %v1427 = vpop.trf.xlu0
    %v1428 = vpop.trf.xlu0
    %v1429 = vpop.trf.xlu0
    %v1430 = vpop.trf.xlu0
    %v1431 = vpop.trf.xlu0
    %v1432 = vpop.trf.xlu0
    %v1433 = vpop.trf.xlu0
    %v1434 = vpop.trf.xlu0
    %v1435 = vpop.trf.xlu0
    %v1436 = vcombine.low %v1324, %v1388
    %v1437 = vcombine.high %v1324, %v1388
    %v1439 = vunpack.c.l.s4 1983009808
    %v1440 = vunpack.c.0.s8 %v1439
    %v1441 = vlaneseq
    %v1442 = vshrl.u32 %v1441, 7
    %v1443 = vsub.s32 %v1440, %v1442
    %v1444 = vrot.slane %v1436, %v1443
    %v1446 = vunpack.c.l.s4 1983009808
    %v1447 = vunpack.c.0.s8 %v1446
    %v1448 = vlaneseq
    %v1449 = vshrl.u32 %v1448, 7
    %v1450 = vsub.s32 %v1447, %v1449
    %v1451 = vrot.slane %v1437, %v1450
    %v1452 = vcombine.low %v1356, %v1420
    %v1453 = vcombine.high %v1356, %v1420
    %v1455 = vunpack.c.l.s4 1983009808
    %v1456 = vunpack.c.0.s8 %v1455
    %v1457 = vlaneseq
    %v1458 = vshrl.u32 %v1457, 7
    %v1459 = vsub.s32 %v1456, %v1458
    %v1460 = vrot.slane %v1452, %v1459
    %v1462 = vunpack.c.l.s4 1983009808
    %v1463 = vunpack.c.0.s8 %v1462
    %v1464 = vlaneseq
    %v1465 = vshrl.u32 %v1464, 7
    %v1466 = vsub.s32 %v1463, %v1465
    %v1467 = vrot.slane %v1453, %v1466
    %v1468 = vcombine.low %v1444, %v1460
    %v1469 = vcombine.high %v1444, %v1460
    %v1471 = vunpack.c.l.s4 1934713408
    %v1472 = vunpack.c.0.s8 %v1471
    %v1473 = vlaneseq
    %v1474 = vshrl.u32 %v1473, 7
    %v1475 = vsub.s32 %v1472, %v1474
    %v1476 = vrot.slane %v1468, %v1475
    %v1478 = vunpack.c.l.s4 1934713408
    %v1479 = vunpack.c.0.s8 %v1478
    %v1480 = vlaneseq
    %v1481 = vshrl.u32 %v1480, 7
    %v1482 = vsub.s32 %v1479, %v1481
    %v1483 = vrot.slane %v1469, %v1482
    %v1484 = vcombine.low %v1451, %v1467
    %v1485 = vcombine.high %v1451, %v1467
    %v1487 = vunpack.c.l.s4 1934713408
    %v1488 = vunpack.c.0.s8 %v1487
    %v1489 = vlaneseq
    %v1490 = vshrl.u32 %v1489, 7
    %v1491 = vsub.s32 %v1488, %v1490
    %v1492 = vrot.slane %v1484, %v1491
    %v1494 = vunpack.c.l.s4 1934713408
    %v1495 = vunpack.c.0.s8 %v1494
    %v1496 = vlaneseq
    %v1497 = vshrl.u32 %v1496, 7
    %v1498 = vsub.s32 %v1495, %v1497
    %v1499 = vrot.slane %v1485, %v1498
    %v1500 = vcombine.high %v1476, 0.0
    %v1501 = vcombine.high %v1483, 0.0
    %v1502 = vcombine.high %v1492, 0.0
    %v1503 = vcombine.high %v1499, 0.0
    %v1504 = vcombine.low %v1325, %v1389
    %v1505 = vcombine.high %v1325, %v1389
    %v1507 = vunpack.c.l.s4 1983009808
    %v1508 = vunpack.c.0.s8 %v1507
    %v1509 = vlaneseq
    %v1510 = vshrl.u32 %v1509, 7
    %v1511 = vsub.s32 %v1508, %v1510
    %v1512 = vrot.slane %v1504, %v1511
    %v1514 = vunpack.c.l.s4 1983009808
    %v1515 = vunpack.c.0.s8 %v1514
    %v1516 = vlaneseq
    %v1517 = vshrl.u32 %v1516, 7
    %v1518 = vsub.s32 %v1515, %v1517
    %v1519 = vrot.slane %v1505, %v1518
    %v1520 = vcombine.low %v1357, %v1421
    %v1521 = vcombine.high %v1357, %v1421
    %v1523 = vunpack.c.l.s4 1983009808
    %v1524 = vunpack.c.0.s8 %v1523
    %v1525 = vlaneseq
    %v1526 = vshrl.u32 %v1525, 7
    %v1527 = vsub.s32 %v1524, %v1526
    %v1528 = vrot.slane %v1520, %v1527
    %v1530 = vunpack.c.l.s4 1983009808
    %v1531 = vunpack.c.0.s8 %v1530
    %v1532 = vlaneseq
    %v1533 = vshrl.u32 %v1532, 7
    %v1534 = vsub.s32 %v1531, %v1533
    %v1535 = vrot.slane %v1521, %v1534
    %v1536 = vcombine.low %v1512, %v1528
    %v1537 = vcombine.high %v1512, %v1528
    %v1539 = vunpack.c.l.s4 1934713408
    %v1540 = vunpack.c.0.s8 %v1539
    %v1541 = vlaneseq
    %v1542 = vshrl.u32 %v1541, 7
    %v1543 = vsub.s32 %v1540, %v1542
    %v1544 = vrot.slane %v1536, %v1543
    %v1546 = vunpack.c.l.s4 1934713408
    %v1547 = vunpack.c.0.s8 %v1546
    %v1548 = vlaneseq
    %v1549 = vshrl.u32 %v1548, 7
    %v1550 = vsub.s32 %v1547, %v1549
    %v1551 = vrot.slane %v1537, %v1550
    %v1552 = vcombine.low %v1519, %v1535
    %v1553 = vcombine.high %v1519, %v1535
    %v1555 = vunpack.c.l.s4 1934713408
    %v1556 = vunpack.c.0.s8 %v1555
    %v1557 = vlaneseq
    %v1558 = vshrl.u32 %v1557, 7
    %v1559 = vsub.s32 %v1556, %v1558
    %v1560 = vrot.slane %v1552, %v1559
    %v1562 = vunpack.c.l.s4 1934713408
    %v1563 = vunpack.c.0.s8 %v1562
    %v1564 = vlaneseq
    %v1565 = vshrl.u32 %v1564, 7
    %v1566 = vsub.s32 %v1563, %v1565
    %v1567 = vrot.slane %v1553, %v1566
    %v1568 = vcombine.high %v1544, 0.0
    %v1569 = vcombine.high %v1551, 0.0
    %v1570 = vcombine.high %v1560, 0.0
    %v1571 = vcombine.high %v1567, 0.0
    %v1572 = vcombine.low %v1476, %v1483
    %v1574 = vunpack.c.l.s4 1983009808
    %v1575 = vunpack.c.0.s8 %v1574
    %v1576 = vlaneseq
    %v1577 = vshrl.u32 %v1576, 7
    %v1578 = vsub.s32 %v1575, %v1577
    %v1579 = vrot.slane %v1572, %v1578
    %v1580 = vcombine.low %v1500, %v1501
    %v1582 = vunpack.c.l.s4 1983009808
    %v1583 = vunpack.c.0.s8 %v1582
    %v1584 = vlaneseq
    %v1585 = vshrl.u32 %v1584, 7
    %v1586 = vsub.s32 %v1583, %v1585
    %v1587 = vrot.slane %v1580, %v1586
    %v1588 = vcombine.low %v1492, %v1499
    %v1590 = vunpack.c.l.s4 1983009808
    %v1591 = vunpack.c.0.s8 %v1590
    %v1592 = vlaneseq
    %v1593 = vshrl.u32 %v1592, 7
    %v1594 = vsub.s32 %v1591, %v1593
    %v1595 = vrot.slane %v1588, %v1594
    %v1596 = vcombine.low %v1502, %v1503
    %v1598 = vunpack.c.l.s4 1983009808
    %v1599 = vunpack.c.0.s8 %v1598
    %v1600 = vlaneseq
    %v1601 = vshrl.u32 %v1600, 7
    %v1602 = vsub.s32 %v1599, %v1601
    %v1603 = vrot.slane %v1596, %v1602
    %v1604 = vcombine.low %v1579, %v1587
    %v1605 = vcombine.high %v1579, %v1587
    %v1607 = vunpack.c.l.s4 1934713408
    %v1608 = vunpack.c.0.s8 %v1607
    %v1609 = vlaneseq
    %v1610 = vshrl.u32 %v1609, 7
    %v1611 = vsub.s32 %v1608, %v1610
    %v1612 = vrot.slane %v1604, %v1611
    %v1614 = vunpack.c.l.s4 1934713408
    %v1615 = vunpack.c.0.s8 %v1614
    %v1616 = vlaneseq
    %v1617 = vshrl.u32 %v1616, 7
    %v1618 = vsub.s32 %v1615, %v1617
    %v1619 = vrot.slane %v1605, %v1618
    %v1620 = vcombine.low %v1595, %v1603
    %v1621 = vcombine.high %v1595, %v1603
    %v1623 = vunpack.c.l.s4 1934713408
    %v1624 = vunpack.c.0.s8 %v1623
    %v1625 = vlaneseq
    %v1626 = vshrl.u32 %v1625, 7
    %v1627 = vsub.s32 %v1624, %v1626
    %v1628 = vrot.slane %v1620, %v1627
    %v1630 = vunpack.c.l.s4 1934713408
    %v1631 = vunpack.c.0.s8 %v1630
    %v1632 = vlaneseq
    %v1633 = vshrl.u32 %v1632, 7
    %v1634 = vsub.s32 %v1631, %v1633
    %v1635 = vrot.slane %v1621, %v1634
    %v1636 = vcombine.low %v1612, %v1628
    %v1637 = vcombine.high %v1612, %v1628
    %v1638 = vcombine.low %v1619, %v1635
    %v1639 = vcombine.high %v1619, %v1635
    %v1640 = vcombine.low %v1544, %v1551
    %v1642 = vunpack.c.l.s4 1983009808
    %v1643 = vunpack.c.0.s8 %v1642
    %v1644 = vlaneseq
    %v1645 = vshrl.u32 %v1644, 7
    %v1646 = vsub.s32 %v1643, %v1645
    %v1647 = vrot.slane %v1640, %v1646
    %v1648 = vcombine.low %v1568, %v1569
    %v1650 = vunpack.c.l.s4 1983009808
    %v1651 = vunpack.c.0.s8 %v1650
    %v1652 = vlaneseq
    %v1653 = vshrl.u32 %v1652, 7
    %v1654 = vsub.s32 %v1651, %v1653
    %v1655 = vrot.slane %v1648, %v1654
    %v1656 = vcombine.low %v1560, %v1567
    %v1658 = vunpack.c.l.s4 1983009808
    %v1659 = vunpack.c.0.s8 %v1658
    %v1660 = vlaneseq
    %v1661 = vshrl.u32 %v1660, 7
    %v1662 = vsub.s32 %v1659, %v1661
    %v1663 = vrot.slane %v1656, %v1662
    %v1664 = vcombine.low %v1570, %v1571
    %v1666 = vunpack.c.l.s4 1983009808
    %v1667 = vunpack.c.0.s8 %v1666
    %v1668 = vlaneseq
    %v1669 = vshrl.u32 %v1668, 7
    %v1670 = vsub.s32 %v1667, %v1669
    %v1671 = vrot.slane %v1664, %v1670
    %v1672 = vcombine.low %v1647, %v1655
    %v1673 = vcombine.high %v1647, %v1655
    %v1675 = vunpack.c.l.s4 1934713408
    %v1676 = vunpack.c.0.s8 %v1675
    %v1677 = vlaneseq
    %v1678 = vshrl.u32 %v1677, 7
    %v1679 = vsub.s32 %v1676, %v1678
    %v1680 = vrot.slane %v1672, %v1679
    %v1682 = vunpack.c.l.s4 1934713408
    %v1683 = vunpack.c.0.s8 %v1682
    %v1684 = vlaneseq
    %v1685 = vshrl.u32 %v1684, 7
    %v1686 = vsub.s32 %v1683, %v1685
    %v1687 = vrot.slane %v1673, %v1686
    %v1688 = vcombine.low %v1663, %v1671
    %v1689 = vcombine.high %v1663, %v1671
    %v1691 = vunpack.c.l.s4 1934713408
    %v1692 = vunpack.c.0.s8 %v1691
    %v1693 = vlaneseq
    %v1694 = vshrl.u32 %v1693, 7
    %v1695 = vsub.s32 %v1692, %v1694
    %v1696 = vrot.slane %v1688, %v1695
    %v1698 = vunpack.c.l.s4 1934713408
    %v1699 = vunpack.c.0.s8 %v1698
    %v1700 = vlaneseq
    %v1701 = vshrl.u32 %v1700, 7
    %v1702 = vsub.s32 %v1699, %v1701
    %v1703 = vrot.slane %v1689, %v1702
    %v1704 = vcombine.low %v1680, %v1696
    %v1705 = vcombine.high %v1680, %v1696
    %v1706 = vcombine.low %v1687, %v1703
    %v1707 = vcombine.high %v1687, %v1703
    %1710 = vrot.lane.b32.xlu0 %v1637, 8
    %v1711 = vpop.permute.xlu0 %1710
    %1712 = vrot.lane.b32.xlu0 %v1705, 8
    %v1713 = vpop.permute.xlu0 %1712
    %1718 = vrot.lane.b32.xlu0 %v1638, 16
    %v1719 = vpop.permute.xlu0 %1718
    %1720 = vrot.lane.b32.xlu0 %v1706, 16
    %v1721 = vpop.permute.xlu0 %1720
    %1726 = vrot.lane.b32.xlu0 %v1639, 24
    %v1727 = vpop.permute.xlu0 %1726
    %1728 = vrot.lane.b32.xlu0 %v1707, 24
    %v1729 = vpop.permute.xlu0 %1728
    %v1732 = vsel %vm403, %v1636, %v1711
    %v1733 = vsel %vm403, %v1704, %v1713
    %v1734 = vsel %vm775, %v1732, %v1719
    %v1735 = vsel %vm775, %v1733, %v1721
    %vm1736 = vcmask 195584
    %v1737 = vsel %vm1736, %v1734, %v1727
    %v1738 = vsel %vm1736, %v1735, %v1729
    %v1739 = vld [vmem:[%s4] sm:$0xff]
    %v1740 = vld [vmem:[%s4 + $0x8] sm:$0xff]
    %v1741 = vld [vmem:[%s4 + $0x10] sm:$0xff]
    %v1742 = vld [vmem:[%s4 + $0x18] sm:$0xff]
    %v1743 = vld [vmem:[%s7 + $0x2] sm:$0x1]
    %v1744 = vlaneseq
    %v1745 = vshrl.u32 %v1744, 7
    %v1746 = vsub.s32 0, %v1745
    %v1747 = vrot.slane %v1743, %v1746
    %v1749 = vsel %vm45, %v1737, 0
    %v1752 = vsel %vm45, %v1738, 0
    %1754 = vmatprep.subr.mxu0 0.0
    %1755 = vmatpush1.msra.mxu0 0.0
    %1756 = vmatprep.subr.mxu0 0.0
    %1757 = vmatpush1.msra.mxu0 0.0
    %1758 = vmatprep.subr.mxu0 0.0
    %1759 = vmatpush1.msra.mxu0 0.0
    %1760 = vmatprep.subr.mxu0 0.0
    %1761 = vmatpush1.msra.mxu0 0.0
    %1762 = vmatprep.subr.mxu0 0.0
    %1763 = vmatpush1.msra.mxu0 0.0
    %1764 = vmatprep.subr.mxu0 0.0
    %1765 = vmatpush1.msra.mxu0 0.0
    %1766 = vmatprep.subr.mxu0 0.0
    %1767 = vmatpush1.msra.mxu0 0.0
    %1768 = vmatprep.subr.mxu0 0.0
    %1769 = vmatpush1.msra.mxu0 0.0
    %1770 = vmatprep.subr.mxu0 0.0
    %1771 = vmatpush1.msra.mxu0 0.0
    %1772 = vmatprep.subr.mxu0 0.0
    %1773 = vmatpush1.msra.mxu0 0.0
    %1774 = vmatprep.subr.mxu0 0.0
    %1775 = vmatpush1.msra.mxu0 0.0
    %1776 = vmatprep.subr.mxu0 0.0
    %1777 = vmatpush1.msra.mxu0 0.0
    %1778 = vmatprep.subr.mxu0 0.0
    %1779 = vmatpush1.msra.mxu0 %v1742
    %1780 = vmatprep.subr.mxu0 0.0
    %1781 = vmatpush1.msra.mxu0 %v1741
    %1782 = vmatprep.subr.mxu0 0.0
    %1783 = vmatpush1.msra.mxu0 %v1740
    %1784 = vmatprep.subr.mxu0 0.0
    %1785 = vmatpush1.msra.mxu0 %v1739
    %1786 = vmatprep.subr.mxu0 0.0
    %1787 = vmatpush2.msra.mxu0 0.0
    %1788 = vmatprep.subr.mxu0 0.0
    %1789 = vmatpush2.msra.mxu0 0.0
    %1790 = vmatprep.subr.mxu0 0.0
    %1791 = vmatpush2.msra.mxu0 0.0
    %1792 = vmatprep.subr.mxu0 0.0
    %1793 = vmatpush2.msra.mxu0 0.0
    %1794 = vmatprep.subr.mxu0 0.0
    %1795 = vmatpush2.msra.mxu0 0.0
    %1796 = vmatprep.subr.mxu0 0.0
    %1797 = vmatpush2.msra.mxu0 0.0
    %1798 = vmatprep.subr.mxu0 0.0
    %1799 = vmatpush2.msra.mxu0 0.0
    %1800 = vmatprep.subr.mxu0 0.0
    %1801 = vmatpush2.msra.mxu0 0.0
    %1802 = vmatprep.subr.mxu0 0.0
    %1803 = vmatpush2.msra.mxu0 0.0
    %1804 = vmatprep.subr.mxu0 0.0
    %1805 = vmatpush2.msra.mxu0 0.0
    %1806 = vmatprep.subr.mxu0 0.0
    %1807 = vmatpush2.msra.mxu0 0.0
    %1808 = vmatprep.subr.mxu0 0.0
    %1809 = vmatpush2.msra.mxu0 0.0
    %1810 = vmatprep.subr.mxu0 0.0
    %1811 = vmatpush2.msra.mxu0 0.0
    %1812 = vmatprep.subr.mxu0 0.0
    %1813 = vmatpush2.msra.mxu0 0.0
    %1814 = vmatprep.subr.mxu0 0.0
    %1815 = vmatpush2.msra.mxu0 0.0
    %1816 = vmatprep.subr.mxu0 0.0
    %1817 = vmatpush2.msra.mxu0 0.0
    %1818 = vmatprep.mubr.f32.mxu0 0.0
    %1819 = vmatmul.mubr.f32.gmra.mxu0 %v1749
    %v1820 = vpop.f32.mrf.mxu0
    %v1821 = vadd.f32 %v1747, %v1820
    %v1822 = vpop.f32.mrf.mxu0
    %1823 = vmatprep.mubr.f32.mxu0 0.0
    %1824 = vmatmul.mubr.f32.gmra.mxu0 %v1752
    %v1825 = vpop.f32.mrf.mxu0
    %v1826 = vadd.f32 %v1747, %v1825
    %v1827 = vpop.f32.mrf.mxu0
    %1828 = vdwg.mxu0
    %v1829 = vadd.f32 %v30, %v1821
    %v1830 = vadd.f32 %v31, %v1826
    %v1831 = vld [vmem:[%s7 + $0x5] sm:$0x1]
    %v1832 = vld [vmem:[%s7 + $0x6] sm:$0x1]
    %v1833 = vsel %vm45, %v1829, 0.0
    %1834 = vadd.xlane.f32.xlu0 %v1833
    %v1835 = vpop.xlane.xlu0 %1834
    %v1836 = vsel %vm45, %v1830, 0.0
    %1837 = vadd.xlane.f32.xlu0 %v1836
    %v1838 = vpop.xlane.xlu0 %1837
    %v1839 = vrcp.pop 32.0
    %v1840 = vmul.f32 %v1835, %v1839
    %v1841 = vmul.f32 %v1838, %v1839
    %v1842 = vsub.f32 %v1829, %v1840
    %v1843 = vsub.f32 %v1830, %v1841
    %v1844 = vmul.f32 %v1842, %v1842
    %v1845 = vmul.f32 %v1843, %v1843
    %v1846 = vsel %vm45, %v1844, 0.0
    %1847 = vadd.xlane.f32.xlu0 %v1846
    %v1848 = vpop.xlane.xlu0 %1847
    %v1849 = vsel %vm45, %v1845, 0.0
    %1850 = vadd.xlane.f32.xlu0 %v1849
    %v1851 = vpop.xlane.xlu0 %1850
    %v1852 = vmul.f32 %v1848, %v1839
    %v1853 = vmul.f32 %v1851, %v1839
    %v1854 = vadd.f32 %v1852, 1e-05
    %v1855 = vadd.f32 %v1853, 1e-05
    %v1856 = vrsqrt.pop %v1854
    %v1857 = vrsqrt.pop %v1855
    %v1858 = vmul.f32 %v1842, %v1856
    %v1859 = vmul.f32 %v1843, %v1857
    %v1860 = vlaneseq
    %v1861 = vshrl.u32 %v1860, 7
    %v1862 = vsub.s32 0, %v1861
    %v1863 = vrot.slane %v1831, %v1862
    %v1864 = vmul.f32 %v1858, %v1863
    %v1865 = vmul.f32 %v1859, %v1863
    %v1866 = vlaneseq
    %v1867 = vshrl.u32 %v1866, 7
    %v1868 = vsub.s32 0, %v1867
    %v1869 = vrot.slane %v1832, %v1868
    %v1870 = vadd.f32 %v1864, %v1869
    %v1871 = vadd.f32 %v1865, %v1869
    %v1872 = vld [vmem:[%s5] sm:$0xff]
    %v1873 = vld [vmem:[%s5 + $0x8] sm:$0xff]
    %v1874 = vld [vmem:[%s5 + $0x10] sm:$0xff]
    %v1875 = vld [vmem:[%s5 + $0x18] sm:$0xff]
    %v1876 = vld [vmem:[%s7 + $0x3] sm:$0x1]
    %v1877 = vlaneseq
    %v1878 = vshrl.u32 %v1877, 7
    %v1879 = vsub.s32 0, %v1878
    %v1880 = vrot.slane %v1876, %v1879
    %v1882 = vsel %vm45, %v1870, 0
    %v1885 = vsel %vm45, %v1871, 0
    %1887 = vmatprep.subr.mxu0 0.0
    %1888 = vmatpush1.msra.mxu0 0.0
    %1889 = vmatprep.subr.mxu0 0.0
    %1890 = vmatpush1.msra.mxu0 0.0
    %1891 = vmatprep.subr.mxu0 0.0
    %1892 = vmatpush1.msra.mxu0 0.0
    %1893 = vmatprep.subr.mxu0 0.0
    %1894 = vmatpush1.msra.mxu0 0.0
    %1895 = vmatprep.subr.mxu0 0.0
    %1896 = vmatpush1.msra.mxu0 0.0
    %1897 = vmatprep.subr.mxu0 0.0
    %1898 = vmatpush1.msra.mxu0 0.0
    %1899 = vmatprep.subr.mxu0 0.0
    %1900 = vmatpush1.msra.mxu0 0.0
    %1901 = vmatprep.subr.mxu0 0.0
    %1902 = vmatpush1.msra.mxu0 0.0
    %1903 = vmatprep.subr.mxu0 0.0
    %1904 = vmatpush1.msra.mxu0 0.0
    %1905 = vmatprep.subr.mxu0 0.0
    %1906 = vmatpush1.msra.mxu0 0.0
    %1907 = vmatprep.subr.mxu0 0.0
    %1908 = vmatpush1.msra.mxu0 0.0
    %1909 = vmatprep.subr.mxu0 0.0
    %1910 = vmatpush1.msra.mxu0 0.0
    %1911 = vmatprep.subr.mxu0 0.0
    %1912 = vmatpush1.msra.mxu0 %v1875
    %1913 = vmatprep.subr.mxu0 0.0
    %1914 = vmatpush1.msra.mxu0 %v1874
    %1915 = vmatprep.subr.mxu0 0.0
    %1916 = vmatpush1.msra.mxu0 %v1873
    %1917 = vmatprep.subr.mxu0 0.0
    %1918 = vmatpush1.msra.mxu0 %v1872
    %1919 = vmatprep.subr.mxu0 0.0
    %1920 = vmatpush2.msra.mxu0 0.0
    %1921 = vmatprep.subr.mxu0 0.0
    %1922 = vmatpush2.msra.mxu0 0.0
    %1923 = vmatprep.subr.mxu0 0.0
    %1924 = vmatpush2.msra.mxu0 0.0
    %1925 = vmatprep.subr.mxu0 0.0
    %1926 = vmatpush2.msra.mxu0 0.0
    %1927 = vmatprep.subr.mxu0 0.0
    %1928 = vmatpush2.msra.mxu0 0.0
    %1929 = vmatprep.subr.mxu0 0.0
    %1930 = vmatpush2.msra.mxu0 0.0
    %1931 = vmatprep.subr.mxu0 0.0
    %1932 = vmatpush2.msra.mxu0 0.0
    %1933 = vmatprep.subr.mxu0 0.0
    %1934 = vmatpush2.msra.mxu0 0.0
    %1935 = vmatprep.subr.mxu0 0.0
    %1936 = vmatpush2.msra.mxu0 0.0
    %1937 = vmatprep.subr.mxu0 0.0
    %1938 = vmatpush2.msra.mxu0 0.0
    %1939 = vmatprep.subr.mxu0 0.0
    %1940 = vmatpush2.msra.mxu0 0.0
    %1941 = vmatprep.subr.mxu0 0.0
    %1942 = vmatpush2.msra.mxu0 0.0
    %1943 = vmatprep.subr.mxu0 0.0
    %1944 = vmatpush2.msra.mxu0 0.0
    %1945 = vmatprep.subr.mxu0 0.0
    %1946 = vmatpush2.msra.mxu0 0.0
    %1947 = vmatprep.subr.mxu0 0.0
    %1948 = vmatpush2.msra.mxu0 0.0
    %1949 = vmatprep.subr.mxu0 0.0
    %1950 = vmatpush2.msra.mxu0 0.0
    %1951 = vmatprep.mubr.f32.mxu0 0.0
    %1952 = vmatmul.mubr.f32.gmra.mxu0 %v1882
    %v1953 = vpop.f32.mrf.mxu0
    %v1954 = vadd.f32 %v1880, %v1953
    %v1955 = vpop.f32.mrf.mxu0
    %1956 = vmatprep.mubr.f32.mxu0 0.0
    %1957 = vmatmul.mubr.f32.gmra.mxu0 %v1885
    %v1958 = vpop.f32.mrf.mxu0
    %v1959 = vadd.f32 %v1880, %v1958
    %v1960 = vpop.f32.mrf.mxu0
    %1961 = vdwg.mxu0
    %v1962 = vmax.f32 %v1954, 0.0
    %v1963 = vmax.f32 %v1959, 0.0
    %v1964 = vld [vmem:[%s6] sm:$0xff]
    %v1965 = vld [vmem:[%s6 + $0x8] sm:$0xff]
    %v1966 = vld [vmem:[%s6 + $0x10] sm:$0xff]
    %v1967 = vld [vmem:[%s6 + $0x18] sm:$0xff]
    %v1968 = vld [vmem:[%s6 + $0x20] sm:$0xff]
    %v1969 = vld [vmem:[%s6 + $0x28] sm:$0xff]
    %v1970 = vld [vmem:[%s6 + $0x30] sm:$0xff]
    %v1971 = vld [vmem:[%s6 + $0x38] sm:$0xff]
    %v1972 = vld [vmem:[%s7 + $0x4] sm:$0x1]
    %v1973 = vlaneseq
    %v1974 = vshrl.u32 %v1973, 7
    %v1975 = vsub.s32 0, %v1974
    %v1976 = vrot.slane %v1972, %v1975
    %vm1977 = vcmask 523264
    %v1979 = vsel %vm1977, %v1962, 0
    %v1982 = vsel %vm1977, %v1963, 0
    %1984 = vmatprep.subr.mxu0 0.0
    %1985 = vmatpush1.msra.mxu0 0.0
    %1986 = vmatprep.subr.mxu0 0.0
    %1987 = vmatpush1.msra.mxu0 0.0
    %1988 = vmatprep.subr.mxu0 0.0
    %1989 = vmatpush1.msra.mxu0 0.0
    %1990 = vmatprep.subr.mxu0 0.0
    %1991 = vmatpush1.msra.mxu0 0.0
    %1992 = vmatprep.subr.mxu0 0.0
    %1993 = vmatpush1.msra.mxu0 0.0
    %1994 = vmatprep.subr.mxu0 0.0
    %1995 = vmatpush1.msra.mxu0 0.0
    %1996 = vmatprep.subr.mxu0 0.0
    %1997 = vmatpush1.msra.mxu0 0.0
    %1998 = vmatprep.subr.mxu0 0.0
    %1999 = vmatpush1.msra.mxu0 0.0
    %2000 = vmatprep.subr.mxu0 0.0
    %2001 = vmatpush1.msra.mxu0 %v1971
    %2002 = vmatprep.subr.mxu0 0.0
    %2003 = vmatpush1.msra.mxu0 %v1970
    %2004 = vmatprep.subr.mxu0 0.0
    %2005 = vmatpush1.msra.mxu0 %v1969
    %2006 = vmatprep.subr.mxu0 0.0
    %2007 = vmatpush1.msra.mxu0 %v1968
    %2008 = vmatprep.subr.mxu0 0.0
    %2009 = vmatpush1.msra.mxu0 %v1967
    %2010 = vmatprep.subr.mxu0 0.0
    %2011 = vmatpush1.msra.mxu0 %v1966
    %2012 = vmatprep.subr.mxu0 0.0
    %2013 = vmatpush1.msra.mxu0 %v1965
    %2014 = vmatprep.subr.mxu0 0.0
    %2015 = vmatpush1.msra.mxu0 %v1964
    %2016 = vmatprep.subr.mxu0 0.0
    %2017 = vmatpush2.msra.mxu0 0.0
    %2018 = vmatprep.subr.mxu0 0.0
    %2019 = vmatpush2.msra.mxu0 0.0
    %2020 = vmatprep.subr.mxu0 0.0
    %2021 = vmatpush2.msra.mxu0 0.0
    %2022 = vmatprep.subr.mxu0 0.0
    %2023 = vmatpush2.msra.mxu0 0.0
    %2024 = vmatprep.subr.mxu0 0.0
    %2025 = vmatpush2.msra.mxu0 0.0
    %2026 = vmatprep.subr.mxu0 0.0
    %2027 = vmatpush2.msra.mxu0 0.0
    %2028 = vmatprep.subr.mxu0 0.0
    %2029 = vmatpush2.msra.mxu0 0.0
    %2030 = vmatprep.subr.mxu0 0.0
    %2031 = vmatpush2.msra.mxu0 0.0
    %2032 = vmatprep.subr.mxu0 0.0
    %2033 = vmatpush2.msra.mxu0 0.0
    %2034 = vmatprep.subr.mxu0 0.0
    %2035 = vmatpush2.msra.mxu0 0.0
    %2036 = vmatprep.subr.mxu0 0.0
    %2037 = vmatpush2.msra.mxu0 0.0
    %2038 = vmatprep.subr.mxu0 0.0
    %2039 = vmatpush2.msra.mxu0 0.0
    %2040 = vmatprep.subr.mxu0 0.0
    %2041 = vmatpush2.msra.mxu0 0.0
    %2042 = vmatprep.subr.mxu0 0.0
    %2043 = vmatpush2.msra.mxu0 0.0
    %2044 = vmatprep.subr.mxu0 0.0
    %2045 = vmatpush2.msra.mxu0 0.0
    %2046 = vmatprep.subr.mxu0 0.0
    %2047 = vmatpush2.msra.mxu0 0.0
    %2048 = vmatprep.mubr.f32.mxu0 0.0
    %2049 = vmatmul.mubr.f32.gmra.mxu0 %v1979
    %v2050 = vpop.f32.mrf.mxu0
    %v2051 = vadd.f32 %v1976, %v2050
    %v2052 = vpop.f32.mrf.mxu0
    %2053 = vmatprep.mubr.f32.mxu0 0.0
    %2054 = vmatmul.mubr.f32.gmra.mxu0 %v1982
    %v2055 = vpop.f32.mrf.mxu0
    %v2056 = vadd.f32 %v1976, %v2055
    %v2057 = vpop.f32.mrf.mxu0
    %2058 = vdwg.mxu0
    %v2059 = vadd.f32 %v1870, %v2051
    %v2060 = vadd.f32 %v1871, %v2056
    %v2061 = vld [vmem:[%s7 + $0x7] sm:$0x1]
    %v2062 = vld [vmem:[%s7 + $0x8] sm:$0x1]
    %v2063 = vsel %vm45, %v2059, 0.0
    %2064 = vadd.xlane.f32.xlu0 %v2063
    %v2065 = vpop.xlane.xlu0 %2064
    %v2066 = vsel %vm45, %v2060, 0.0
    %2067 = vadd.xlane.f32.xlu0 %v2066
    %v2068 = vpop.xlane.xlu0 %2067
    %v2069 = vmul.f32 %v2065, %v1839
    %v2070 = vmul.f32 %v2068, %v1839
    %v2071 = vsub.f32 %v2059, %v2069
    %v2072 = vsub.f32 %v2060, %v2070
    %v2073 = vmul.f32 %v2071, %v2071
    %v2074 = vmul.f32 %v2072, %v2072
    %v2075 = vsel %vm45, %v2073, 0.0
    %2076 = vadd.xlane.f32.xlu0 %v2075
    %v2077 = vpop.xlane.xlu0 %2076
    %v2078 = vsel %vm45, %v2074, 0.0
    %2079 = vadd.xlane.f32.xlu0 %v2078
    %v2080 = vpop.xlane.xlu0 %2079
    %v2081 = vmul.f32 %v2077, %v1839
    %v2082 = vmul.f32 %v2080, %v1839
    %v2083 = vadd.f32 %v2081, 1e-05
    %v2084 = vadd.f32 %v2082, 1e-05
    %v2085 = vrsqrt.pop %v2083
    %v2086 = vrsqrt.pop %v2084
    %v2087 = vmul.f32 %v2071, %v2085
    %v2088 = vmul.f32 %v2072, %v2086
    %v2089 = vlaneseq
    %v2090 = vshrl.u32 %v2089, 7
    %v2091 = vsub.s32 0, %v2090
    %v2092 = vrot.slane %v2061, %v2091
    %v2093 = vmul.f32 %v2087, %v2092
    %v2094 = vmul.f32 %v2088, %v2092
    %v2095 = vlaneseq
    %v2096 = vshrl.u32 %v2095, 7
    %v2097 = vsub.s32 0, %v2096
    %v2098 = vrot.slane %v2062, %v2097
    %v2099 = vadd.f32 %v2093, %v2098
    %v2100 = vadd.f32 %v2094, %v2098
    %2101 = vst.msk [vmem:[#allocation2] sm:$0xff] %vm45, %v2099
    %2102 = vst.msk [vmem:[#allocation2 + $0x8] sm:$0xff] %vm45, %v2100
    // Predicated region
    $region34: #{transformer_encoder_layer.1} parent=1 // pred_check
      _
    $region35: #{transformer_encoder_layer.1} parent=1 // pred_check_branch
      %2104 = sbr.rel (0) target = $region37
    $region36: #{transformer_encoder_layer.1} parent=1 // pred_region
      %s2106 = ssub.s32 256, 256
      %2107 = vsyncadd [#allocation3], %s2106
      %s2108 = sshll.u32 [#allocation2], 4
      %s2109 = int_to_ptr.vmem [resolvable:$true] %s2108
      %2114 = dma.vmem_to_hbm [thread:$0]  %s2109, 256, %s8, [#allocation3], 128, 128, 8
    $region37: #{transformer_encoder_layer.1} parent=1 // pred_fallthru
      _
    // Predicated region
    $region38: #{transformer_encoder_layer.1} parent=1 // pred_check
      _
    $region39: #{transformer_encoder_layer.1} parent=1 // pred_check_branch
      %2116 = sbr.rel (0) target = $region41
    $region40: #{transformer_encoder_layer.1} parent=1 // pred_region
      %2117 = dma.done [#allocation3], 256
    $region41: #{transformer_encoder_layer.1} parent=1 // pred_fallthru
      _
    %2118 = vsyncpa [#allocation3], 1

</llo_original>
